<compile_context>
chip_gen: v5e
topology: v5e:2x2
jax: 0.10.0
libtpu: 0.0.40
codegen_flags: <defaults>
</compile_context>

<pallas_src>
import functools

import jax
import jax.numpy as jnp
import numpy as np
from jax.experimental import pallas as pl
from jax.experimental.pallas import tpu as pltpu

C_IN = 36
L = 128
K = C_IN * L          # 4608: fused (conv channel x length) contraction dim
N_CLASSES = 2


def ts_enc_kernel(x_ref, wc_ref, beff_ref, w2t_ref, b2_ref, out_ref, *, mxu_dtype):
    # x_ref    : (TILE_B, 4608)  streamed input tile (conv channels flattened)
    # wc_ref   : (4608, 128)     fused conv1d(k=1) + fc1 weight (VMEM-resident)
    # beff_ref : (1, 128)        fused conv bias + fc1 bias
    # w2t_ref  : (128, 2)        fc2 weight, pre-transposed to (in, out)
    # b2_ref   : (1, 2)          fc2 bias
    # out_ref  : (TILE_B, 2)     log-probabilities
    x = x_ref[...]
    if x.dtype != jnp.dtype(mxu_dtype):
        # Cast in-kernel (VMEM->vreg) so no extra HBM pass is spent on casting.
        x = x.astype(mxu_dtype)

    # Fused conv + fc1 (+ bias) + ReLU.  Dropout is eval-mode identity.
    # TODO(synk): nn.Dropout(0.2) training-mode masking not implemented; eval
    # semantics (identity) are used here.
    h = jnp.dot(x, wc_ref[...], preferred_element_type=jnp.float32)
    h = jnp.maximum(h + beff_ref[...], 0.0)                       # (TILE_B, 128) f32

    o = jnp.dot(h, w2t_ref[...], preferred_element_type=jnp.float32)
    o = o + b2_ref[...]                                           # (TILE_B, 2)

    # Numerically stable log_softmax over the class dim.  (Output block is
    # lane-sparse -- 2 of 128 lanes -- but output bytes are ~0.04% of input
    # bytes, so this is a latency footnote, not a throughput issue.)
    m = jnp.max(o, axis=-1, keepdims=True)
    s = o - m
    lse = jnp.log(jnp.sum(jnp.exp(s), axis=-1, keepdims=True))
    out_ref[...] = (s - lse).astype(out_ref.dtype)


def _fuse_params(conv_w, conv_b, w1, b1, w2, b2, mxu_dtype):
    """Fold conv1d(36->1, k=1) into fc1, and pre-transpose fc2."""
    cw = conv_w.reshape(C_IN).astype(jnp.float32)                 # (36,)
    cb = conv_b.reshape(()).astype(jnp.float32)                   # scalar
    w1f = w1.astype(jnp.float32)                                  # (128 out, 128 in)
    # W_comb[(c, l), k] = cw[c] * W1[k, l]
    w_comb = (cw[:, None, None] * w1f.T[None, :, :]).reshape(K, L)
    b_eff = cb * jnp.sum(w1f, axis=1) + b1.astype(jnp.float32)    # (128,)
    return (w_comb.astype(mxu_dtype),
            b_eff.reshape(1, L),
            w2.T.astype(jnp.float32),                             # (128, 2)
            b2.reshape(1, N_CLASSES).astype(jnp.float32))


def _choose_tile_b(B, tile_b, x_itemsize):
    """Batch tile: >= 2 grid steps once B >= 16 (megacore + pipeline overlap),
    8-aligned, and clamped so 2 double-buffered x tiles stay <= ~40 MiB."""
    tb_cap = max(8, (int((40 << 20) // (2 * K * x_itemsize)) // 8) * 8)
    if B < 16:
        return B                                  # one full-array block
    n_steps = max(2, pl.cdiv(B, tile_b))
    if n_steps % 2:
        n_steps += 1                              # even steps -> balanced TC split
    tb = ((pl.cdiv(B, n_steps) + 7) // 8) * 8
    return min(tb, tb_cap)


def ts_enc_forward(x, conv_w, conv_b, w1, b1, w2, b2, *,
                   tile_b=None, mxu_dtype=jnp.bfloat16):
    """x: (B, 36, 128). Returns (B, 2) log-probabilities (eval mode).

    x streams at its incoming dtype (pass bf16 x to halve HBM traffic); the
    big contraction runs on the MXU in `mxu_dtype` with f32 accumulation.
    Use mxu_dtype=jnp.float32 for exact parity with the PyTorch f32 module.
    """
    B = x.shape[0]
    w_comb, b_eff, w2t, b2r = _fuse_params(conv_w, conv_b, w1, b1, w2, b2,
                                           mxu_dtype)
    x2d = x.reshape(B, K)                         # contiguous reshape: no copy
    x_item = jnp.dtype(x2d.dtype).itemsize
    wc_item = jnp.dtype(mxu_dtype).itemsize

    if tile_b is None:
        # Sized for the worst case (v7x: 64 MiB VMEM/TC).  On v5e/v6e
        # (128 MiB VMEM) tile_b=1024 (f32 x) / 2048 (bf16 x) also works.
        tile_b = 1024 if x_item <= 2 else 512
    tb = _choose_tile_b(B, tile_b, x_item)
    grid = (pl.cdiv(B, tb),)                      # partial tail block, no jnp.pad

    # VMEM budget: x/out double-buffered by the pipeline; weights resident
    # (budgeted x2 to be conservative).  Keep headroom under 64 MiB/TC.
    vmem_need = 2 * tb * K * x_item
    vmem_need += 2 * (K * L * wc_item + L * 4 + L * N_CLASSES * 4 + N_CLASSES * 4)
    vmem_need += 2 * tb * N_CLASSES * 4
    vmem_limit = int(min(vmem_need + (8 << 20), 64 << 20))

    cost = pl.CostEstimate(
        flops=2 * B * K * L + 2 * B * L * N_CLASSES,
        transcendentals=B * (N_CLASSES + 1),
        bytes_accessed=B * K * x_item + K * L * wc_item + B * N_CLASSES * 4,
    )

    kernel = functools.partial(ts_enc_kernel, mxu_dtype=mxu_dtype)
    return pl.pallas_call(
        kernel,
        out_shape=jax.ShapeDtypeStruct((B, N_CLASSES), jnp.float32),
        grid_spec=pltpu.PrefetchScalarGridSpec(
            num_scalar_prefetch=0,
            grid=grid,
            in_specs=[
                pl.BlockSpec((tb, K), lambda i: (i, 0)),           # x (streamed)
                pl.BlockSpec((K, L), lambda i: (0, 0)),            # W_comb (resident)
                pl.BlockSpec((1, L), lambda i: (0, 0)),            # b_eff
                pl.BlockSpec((L, N_CLASSES), lambda i: (0, 0)),    # W2^T
                pl.BlockSpec((1, N_CLASSES), lambda i: (0, 0)),    # b2
            ],
            out_specs=pl.BlockSpec((tb, N_CLASSES), lambda i: (i, 0)),
        ),
        compiler_params=pltpu.CompilerParams(
            dimension_semantics=("parallel",),     # megacore sharding on v7x
            vmem_limit_bytes=vmem_limit,
        ),
        cost_estimate=cost,
    )(x2d, w_comb, b_eff, w2t, b2r)


def init_params(key):
    k = jax.random.split(key, 6)
    # Deterministic synthetic init (same shapes as the PyTorch module).
    conv_w = jax.random.normal(k[0], (1, C_IN, 1), jnp.float32) * 0.1
    conv_b = jax.random.normal(k[1], (1,), jnp.float32) * 0.1
    w1 = jax.random.normal(k[2], (L, L), jnp.float32) * (1.0 / np.sqrt(L))
    b1 = jax.random.normal(k[3], (L,), jnp.float32) * 0.1
    w2 = jax.random.normal(k[4], (N_CLASSES, L), jnp.float32) * (1.0 / np.sqrt(L))
    b2 = jax.random.normal(k[5], (N_CLASSES,), jnp.float32) * 0.1
    return conv_w, conv_b, w1, b1, w2, b2


def ts_enc_ref(x, conv_w, conv_b, w1, b1, w2, b2):
    # Pure-JAX reference of the PyTorch forward (eval mode), f32 precision.
    hp = jax.lax.Precision.HIGHEST
    y = jnp.einsum("bcl,oc->bol", x, conv_w[:, :, 0], precision=hp)
    y = y + conv_b[None, :, None]
    h = jnp.einsum("bol,kl->bok", y, w1, precision=hp) + b1
    h = jnp.maximum(h, 0.0)
    o = jnp.einsum("bol,kl->bok", h, w2, precision=hp) + b2
    o = jnp.squeeze(o, axis=1)                                    # (B, 2)
    return jax.nn.log_softmax(o, axis=1)


if __name__ == "__main__":
    key = jax.random.PRNGKey(0)
    kx1, kx2, kp = jax.random.split(key, 3)
    params = init_params(kp)

    # 1) f32-parity path, tiny batch (B=2): single full-array block.
    B = 2
    x = jax.random.normal(kx1, (B, C_IN, L), jnp.float32)
    fwd_parity = jax.jit(lambda xx, *p: ts_enc_forward(xx, *p,
                                                       mxu_dtype=jnp.float32))
    out = jax.block_until_ready(fwd_parity(x, *params))
    ref = ts_enc_ref(x, *params)
    np.testing.assert_allclose(np.asarray(out), np.asarray(ref),
                               rtol=1e-4, atol=1e-5)

    # 2) Default path (bf16 MXU), B=20: auto tile -> 2 grid steps with a
    #    partial tail block (no padding copy of x).
    B2 = 20
    x2 = jax.random.normal(kx2, (B2, C_IN, L), jnp.float32)
    fwd = jax.jit(ts_enc_forward)
    out2 = jax.block_until_ready(fwd(x2, *params))
    ref2 = ts_enc_ref(x2, *params)
    np.testing.assert_allclose(np.asarray(out2), np.asarray(ref2),
                               rtol=2e-2, atol=2e-2)

    # 3) Small explicit tile (tile_b=8): 3 grid steps, exercises the pipeline.
    fwd_tiled = jax.jit(lambda xx, *p: ts_enc_forward(xx, *p, tile_b=8))
    out3 = jax.block_until_ready(fwd_tiled(x2, *params))
    np.testing.assert_allclose(np.asarray(out3), np.asarray(ref2),
                               rtol=2e-2, atol=2e-2)

    # 4) bf16-streamed input (halves HBM traffic of the dominant tensor).
    out4 = jax.block_until_ready(fwd(x2.astype(jnp.bfloat16), *params))
    np.testing.assert_allclose(np.asarray(out4), np.asarray(ref2),
                               rtol=3e-2, atol=3e-2)

    print("KERNEL_OK")
</pallas_src>

<mosaic_0001>
module attributes {stable_mosaic.version = 11 : i64} {
  func.func @ts_enc_kernel(%arg0: i32, %arg1: memref<2x4608xf32, #tpu.memory_space<vmem>>, %arg2: memref<4608x128xf32, #tpu.memory_space<vmem>>, %arg3: memref<1x128xf32, #tpu.memory_space<vmem>>, %arg4: memref<128x2xf32, #tpu.memory_space<vmem>>, %arg5: memref<1x2xf32, #tpu.memory_space<vmem>>, %arg6: memref<2x2xf32, #tpu.memory_space<vmem>>) attributes {dimension_semantics = [#tpu.dimension_semantics<parallel>], iteration_bounds = array<i64: 1>, scalar_prefetch = 0 : i64, scratch_operands = 0 : i64, tpu.core_type = #tpu.core_type<tc>, window_params = [{transform_indices = @transform_0, window_bounds = array<i64: 2, 4608>}, {pipeline_mode = #tpu.pipeline_mode<synchronous>, transform_indices = @transform_1, window_bounds = array<i64: 4608, 128>}, {pipeline_mode = #tpu.pipeline_mode<synchronous>, transform_indices = @transform_2, window_bounds = array<i64: 1, 128>}, {pipeline_mode = #tpu.pipeline_mode<synchronous>, transform_indices = @transform_3, window_bounds = array<i64: 128, 2>}, {pipeline_mode = #tpu.pipeline_mode<synchronous>, transform_indices = @transform_4, window_bounds = array<i64: 1, 2>}, {transform_indices = @transform_5, window_bounds = array<i64: 2, 2>}]} {
    %c0 = arith.constant 0 : index
    %c0_0 = arith.constant 0 : index
    %0 = vector.load %arg1[%c0, %c0_0] : memref<2x4608xf32, #tpu.memory_space<vmem>>, vector<2x4608xf32>
    %c0_1 = arith.constant 0 : index
    %c0_2 = arith.constant 0 : index
    %1 = vector.load %arg2[%c0_1, %c0_2] : memref<4608x128xf32, #tpu.memory_space<vmem>>, vector<4608x128xf32>
    %cst = arith.constant dense<0.000000e+00> : vector<2x128xf32>
    %2 = tpu.matmul %0, %1, %cst {dimension_numbers = #tpu.dot_dimension_numbers<[1], [0], [0], [1], [0, 0, 1, 1], [], []>} : vector<2x4608xf32>, vector<4608x128xf32>, vector<2x128xf32> -> vector<2x128xf32>
    %c0_3 = arith.constant 0 : index
    %c0_4 = arith.constant 0 : index
    %3 = vector.load %arg3[%c0_3, %c0_4] : memref<1x128xf32, #tpu.memory_space<vmem>>, vector<1x128xf32>
    %4 = vector.broadcast %3 : vector<1x128xf32> to vector<2x128xf32>
    %5 = arith.addf %2, %4 : vector<2x128xf32>
    %cst_5 = arith.constant 0.000000e+00 : f32
    %6 = vector.broadcast %cst_5 : f32 to vector<2x128xf32>
    %7 = arith.maximumf %5, %6 : vector<2x128xf32>
    %c0_6 = arith.constant 0 : index
    %c0_7 = arith.constant 0 : index
    %8 = vector.load %arg4[%c0_6, %c0_7] : memref<128x2xf32, #tpu.memory_space<vmem>>, vector<128x2xf32>
    %cst_8 = arith.constant dense<0.000000e+00> : vector<2x2xf32>
    %9 = tpu.matmul %7, %8, %cst_8 {dimension_numbers = #tpu.dot_dimension_numbers<[1], [0], [0], [1], [0, 0, 1, 1], [], []>} : vector<2x128xf32>, vector<128x2xf32>, vector<2x2xf32> -> vector<2x2xf32>
    %c0_9 = arith.constant 0 : index
    %c0_10 = arith.constant 0 : index
    %10 = vector.load %arg5[%c0_9, %c0_10] : memref<1x2xf32, #tpu.memory_space<vmem>>, vector<1x2xf32>
    %11 = vector.broadcast %10 : vector<1x2xf32> to vector<2x2xf32>
    %12 = arith.addf %9, %11 : vector<2x2xf32>
    %cst_11 = arith.constant dense<0xFF800000> : vector<2xf32>
    %13 = vector.multi_reduction <maximumf>, %12, %cst_11 [1] : vector<2x2xf32> to vector<2xf32>
    %14 = vector.shape_cast %13 : vector<2xf32> to vector<2x1xf32>
    %15 = vector.broadcast %14 : vector<2x1xf32> to vector<2x2xf32>
    %16 = arith.subf %12, %15 : vector<2x2xf32>
    %17 = math.exp %16 : vector<2x2xf32>
    %cst_12 = arith.constant dense<0.000000e+00> : vector<2xf32>
    %18 = vector.multi_reduction <add>, %17, %cst_12 [1] : vector<2x2xf32> to vector<2xf32>
    %19 = vector.shape_cast %18 : vector<2xf32> to vector<2x1xf32>
    %20 = math.log %19 : vector<2x1xf32>
    %21 = vector.broadcast %20 : vector<2x1xf32> to vector<2x2xf32>
    %22 = arith.subf %16, %21 : vector<2x2xf32>
    %c0_13 = arith.constant 0 : index
    %c0_14 = arith.constant 0 : index
    %23 = vector.load %arg6[%c0_13, %c0_14] : memref<2x2xf32, #tpu.memory_space<vmem>>, vector<2x2xf32>
    tpu.vector_store %arg6[%c0_13, %c0_14], %22 {strides = array<i32>} : memref<2x2xf32, #tpu.memory_space<vmem>>, vector<2x2xf32>,
    return
  }
  func.func @transform_0(%arg0: i32) -> (i32, i32) {
    %c0_i32 = arith.constant 0 : i32
    %c0_i32_0 = arith.constant 0 : i32
    return %arg0, %c0_i32 : i32, i32
  }
  func.func @transform_1(%arg0: i32) -> (i32, i32) {
    %c0_i32 = arith.constant 0 : i32
    %c0_i32_0 = arith.constant 0 : i32
    %c0_i32_1 = arith.constant 0 : i32
    return %c0_i32, %c0_i32_0 : i32, i32
  }
  func.func @transform_2(%arg0: i32) -> (i32, i32) {
    %c0_i32 = arith.constant 0 : i32
    %c0_i32_0 = arith.constant 0 : i32
    %c0_i32_1 = arith.constant 0 : i32
    return %c0_i32, %c0_i32_0 : i32, i32
  }
  func.func @transform_3(%arg0: i32) -> (i32, i32) {
    %c0_i32 = arith.constant 0 : i32
    %c0_i32_0 = arith.constant 0 : i32
    %c0_i32_1 = arith.constant 0 : i32
    return %c0_i32, %c0_i32_0 : i32, i32
  }
  func.func @transform_4(%arg0: i32) -> (i32, i32) {
    %c0_i32 = arith.constant 0 : i32
    %c0_i32_0 = arith.constant 0 : i32
    %c0_i32_1 = arith.constant 0 : i32
    return %c0_i32, %c0_i32_0 : i32, i32
  }
  func.func @transform_5(%arg0: i32) -> (i32, i32) {
    %c0_i32 = arith.constant 0 : i32
    %c0_i32_0 = arith.constant 0 : i32
    return %arg0, %c0_i32 : i32, i32
  }
}

</mosaic_0001>

<llo_original>
// kernel: _lambda_.1
$region0: #{_lambda_.1}
  #allocation0 [shape = 'u32[]', space=smem, size = 0x4, offset = 0x4, fixed_abs, tag = 'smem constant byte address 0x4 - core index']
  #allocation1 [shape = 'u32[72,128]{1,0:T(1,128)}', space=vmem, size = 0x9000, scoped, tag = 'internal scratch']
  %s0 = inlined_call_operand.vmem [shape: f32[2,4608], index: 0, kind: input, shape index: {}]
  %s1 = inlined_call_operand.vmem [shape: f32[4608,128], index: 1, kind: input, shape index: {}]
  %s2 = inlined_call_operand.vmem [shape: f32[1,128], index: 2, kind: input, shape index: {}]
  %s3 = inlined_call_operand.vmem [shape: f32[128,2], index: 3, kind: input, shape index: {}]
  %s4 = inlined_call_operand.vmem [shape: f32[1,2], index: 4, kind: input, shape index: {}]
  %s5 = inlined_call_operand.hbm [shape: f32[2,2], index: 5, kind: output, shape index: {}]
  %s6 = sld [smem:[#allocation0]]
  $region30: #{_lambda_.1} parent=0
    _
  %s8 = ssub.s32 1, %s6
  %s9 = scalar_select 0, %s8, %s6
  $region1: #{_lambda_.1} parent=0
    #allocation2 [shape = 'u8[1024]{0}', space=vmem, size = 0x400, scoped, tag = 'output window, operand 0, single buffered']
    #allocation3 [shape = 's32[1]{0}', space=sflag, size = 0x4, scoped, tag = 'scoped memory for _lambda_.1']
    %10 = vsyncpa [#allocation3], 0
    // Predicated region
    $region2: #{_lambda_.1} parent=1 // pred_check
      _
    $region3: #{_lambda_.1} parent=1 // pred_check_branch
      %12 = sbr.rel (0) target = $region5
    $region4: #{_lambda_.1} parent=1 // pred_region
      _
    $region5: #{_lambda_.1} parent=1 // pred_fallthru
      _
    // Predicated region
    $region6: #{_lambda_.1} parent=1 // pred_check
      _
    $region7: #{_lambda_.1} parent=1 // pred_check_branch
      %14 = sbr.rel (0) target = $region9
    $region8: #{_lambda_.1} parent=1 // pred_region
      _
    $region9: #{_lambda_.1} parent=1 // pred_fallthru
      _
    // Predicated region
    $region10: #{_lambda_.1} parent=1 // pred_check
      _
    $region11: #{_lambda_.1} parent=1 // pred_check_branch
      %16 = sbr.rel (0) target = $region13
    $region12: #{_lambda_.1} parent=1 // pred_region
      _
    $region13: #{_lambda_.1} parent=1 // pred_fallthru
      _
    // Predicated region
    $region14: #{_lambda_.1} parent=1 // pred_check
      _
    $region15: #{_lambda_.1} parent=1 // pred_check_branch
      %18 = sbr.rel (0) target = $region17
    $region16: #{_lambda_.1} parent=1 // pred_region
      _
    $region17: #{_lambda_.1} parent=1 // pred_fallthru
      _
    // Predicated region
    $region18: #{_lambda_.1} parent=1 // pred_check
      _
    $region19: #{_lambda_.1} parent=1 // pred_check_branch
      %20 = sbr.rel (0) target = $region21
    $region20: #{_lambda_.1} parent=1 // pred_region
      _
    $region21: #{_lambda_.1} parent=1 // pred_fallthru
      _
    %v21 = vld [vmem:[%s0] sm:$0xff]
    %v22 = vld [vmem:[%s0 + $0x8] sm:$0xff]
    %v23 = vld [vmem:[%s0 + $0x10] sm:$0xff]
    %v24 = vld [vmem:[%s0 + $0x18] sm:$0xff]
    %v25 = vld [vmem:[%s0 + $0x20] sm:$0xff]
    %v26 = vld [vmem:[%s0 + $0x28] sm:$0xff]
    %v27 = vld [vmem:[%s0 + $0x30] sm:$0xff]
    %v28 = vld [vmem:[%s0 + $0x38] sm:$0xff]
    %v29 = vld [vmem:[%s0 + $0x40] sm:$0xff]
    %v30 = vld [vmem:[%s1] sm:$0xff]
    %v31 = vld [vmem:[%s1 + $0x8] sm:$0xff]
    %v32 = vld [vmem:[%s1 + $0x10] sm:$0xff]
    %v33 = vld [vmem:[%s1 + $0x18] sm:$0xff]
    %v34 = vld [vmem:[%s1 + $0x20] sm:$0xff]
    %v35 = vld [vmem:[%s1 + $0x28] sm:$0xff]
    %v36 = vld [vmem:[%s1 + $0x30] sm:$0xff]
    %v37 = vld [vmem:[%s1 + $0x38] sm:$0xff]
    %v38 = vld [vmem:[%s1 + $0x40] sm:$0xff]
    %v39 = vld [vmem:[%s1 + $0x48] sm:$0xff]
    %v40 = vld [vmem:[%s1 + $0x50] sm:$0xff]
    %v41 = vld [vmem:[%s1 + $0x58] sm:$0xff]
    %v42 = vld [vmem:[%s1 + $0x60] sm:$0xff]
    %v43 = vld [vmem:[%s1 + $0x68] sm:$0xff]
    %v44 = vld [vmem:[%s1 + $0x70] sm:$0xff]
    %v45 = vld [vmem:[%s1 + $0x78] sm:$0xff]
    %v46 = vld [vmem:[%s1 + $0x80] sm:$0xff]
    %v47 = vld [vmem:[%s1 + $0x88] sm:$0xff]
    %v48 = vld [vmem:[%s1 + $0x90] sm:$0xff]
    %v49 = vld [vmem:[%s1 + $0x98] sm:$0xff]
    %v50 = vld [vmem:[%s1 + $0xa0] sm:$0xff]
    %v51 = vld [vmem:[%s1 + $0xa8] sm:$0xff]
    %v52 = vld [vmem:[%s1 + $0xb0] sm:$0xff]
    %v53 = vld [vmem:[%s1 + $0xb8] sm:$0xff]
    %v54 = vld [vmem:[%s1 + $0xc0] sm:$0xff]
    %v55 = vld [vmem:[%s1 + $0xc8] sm:$0xff]
    %v56 = vld [vmem:[%s1 + $0xd0] sm:$0xff]
    %v57 = vld [vmem:[%s1 + $0xd8] sm:$0xff]
    %v58 = vld [vmem:[%s1 + $0xe0] sm:$0xff]
    %v59 = vld [vmem:[%s1 + $0xe8] sm:$0xff]
    %v60 = vld [vmem:[%s1 + $0xf0] sm:$0xff]
    %v61 = vld [vmem:[%s1 + $0xf8] sm:$0xff]
    %v62 = vld [vmem:[%s1 + $0x100] sm:$0xff]
    %v63 = vld [vmem:[%s1 + $0x108] sm:$0xff]
    %v64 = vld [vmem:[%s1 + $0x110] sm:$0xff]
    %v65 = vld [vmem:[%s1 + $0x118] sm:$0xff]
    %v66 = vld [vmem:[%s1 + $0x120] sm:$0xff]
    %v67 = vld [vmem:[%s1 + $0x128] sm:$0xff]
    %v68 = vld [vmem:[%s1 + $0x130] sm:$0xff]
    %v69 = vld [vmem:[%s1 + $0x138] sm:$0xff]
    %v70 = vld [vmem:[%s1 + $0x140] sm:$0xff]
    %v71 = vld [vmem:[%s1 + $0x148] sm:$0xff]
    %v72 = vld [vmem:[%s1 + $0x150] sm:$0xff]
    %v73 = vld [vmem:[%s1 + $0x158] sm:$0xff]
    %v74 = vld [vmem:[%s1 + $0x160] sm:$0xff]
    %v75 = vld [vmem:[%s1 + $0x168] sm:$0xff]
    %v76 = vld [vmem:[%s1 + $0x170] sm:$0xff]
    %v77 = vld [vmem:[%s1 + $0x178] sm:$0xff]
    %v78 = vld [vmem:[%s1 + $0x180] sm:$0xff]
    %v79 = vld [vmem:[%s1 + $0x188] sm:$0xff]
    %v80 = vld [vmem:[%s1 + $0x190] sm:$0xff]
    %v81 = vld [vmem:[%s1 + $0x198] sm:$0xff]
    %v82 = vld [vmem:[%s1 + $0x1a0] sm:$0xff]
    %v83 = vld [vmem:[%s1 + $0x1a8] sm:$0xff]
    %v84 = vld [vmem:[%s1 + $0x1b0] sm:$0xff]
    %v85 = vld [vmem:[%s1 + $0x1b8] sm:$0xff]
    %v86 = vld [vmem:[%s1 + $0x1c0] sm:$0xff]
    %v87 = vld [vmem:[%s1 + $0x1c8] sm:$0xff]
    %v88 = vld [vmem:[%s1 + $0x1d0] sm:$0xff]
    %v89 = vld [vmem:[%s1 + $0x1d8] sm:$0xff]
    %v90 = vld [vmem:[%s1 + $0x1e0] sm:$0xff]
    %v91 = vld [vmem:[%s1 + $0x1e8] sm:$0xff]
    %v92 = vld [vmem:[%s1 + $0x1f0] sm:$0xff]
    %v93 = vld [vmem:[%s1 + $0x1f8] sm:$0xff]
    %v94 = vld [vmem:[%s1 + $0x200] sm:$0xff]
    %v95 = vld [vmem:[%s1 + $0x208] sm:$0xff]
    %v96 = vld [vmem:[%s1 + $0x210] sm:$0xff]
    %v97 = vld [vmem:[%s1 + $0x218] sm:$0xff]
    %v98 = vld [vmem:[%s1 + $0x220] sm:$0xff]
    %v99 = vld [vmem:[%s1 + $0x228] sm:$0xff]
    %v100 = vld [vmem:[%s1 + $0x230] sm:$0xff]
    %v101 = vld [vmem:[%s1 + $0x238] sm:$0xff]
    %v102 = vld [vmem:[%s1 + $0x240] sm:$0xff]
    %v103 = vld [vmem:[%s1 + $0x248] sm:$0xff]
    %v104 = vld [vmem:[%s1 + $0x250] sm:$0xff]
    %v105 = vld [vmem:[%s1 + $0x258] sm:$0xff]
    %v106 = vld [vmem:[%s1 + $0x260] sm:$0xff]
    %v107 = vld [vmem:[%s1 + $0x268] sm:$0xff]
    %v108 = vld [vmem:[%s1 + $0x270] sm:$0xff]
    %v109 = vld [vmem:[%s1 + $0x278] sm:$0xff]
    %v110 = vld [vmem:[%s1 + $0x280] sm:$0xff]
    %v111 = vld [vmem:[%s1 + $0x288] sm:$0xff]
    %v112 = vld [vmem:[%s1 + $0x290] sm:$0xff]
    %v113 = vld [vmem:[%s1 + $0x298] sm:$0xff]
    %v114 = vld [vmem:[%s1 + $0x2a0] sm:$0xff]
    %v115 = vld [vmem:[%s1 + $0x2a8] sm:$0xff]
    %v116 = vld [vmem:[%s1 + $0x2b0] sm:$0xff]
    %v117 = vld [vmem:[%s1 + $0x2b8] sm:$0xff]
    %v118 = vld [vmem:[%s1 + $0x2c0] sm:$0xff]
    %v119 = vld [vmem:[%s1 + $0x2c8] sm:$0xff]
    %v120 = vld [vmem:[%s1 + $0x2d0] sm:$0xff]
    %v121 = vld [vmem:[%s1 + $0x2d8] sm:$0xff]
    %v122 = vld [vmem:[%s1 + $0x2e0] sm:$0xff]
    %v123 = vld [vmem:[%s1 + $0x2e8] sm:$0xff]
    %v124 = vld [vmem:[%s1 + $0x2f0] sm:$0xff]
    %v125 = vld [vmem:[%s1 + $0x2f8] sm:$0xff]
    %v126 = vld [vmem:[%s1 + $0x300] sm:$0xff]
    %v127 = vld [vmem:[%s1 + $0x308] sm:$0xff]
    %v128 = vld [vmem:[%s1 + $0x310] sm:$0xff]
    %v129 = vld [vmem:[%s1 + $0x318] sm:$0xff]
    %v130 = vld [vmem:[%s1 + $0x320] sm:$0xff]
    %v131 = vld [vmem:[%s1 + $0x328] sm:$0xff]
    %v132 = vld [vmem:[%s1 + $0x330] sm:$0xff]
    %v133 = vld [vmem:[%s1 + $0x338] sm:$0xff]
    %v134 = vld [vmem:[%s1 + $0x340] sm:$0xff]
    %v135 = vld [vmem:[%s1 + $0x348] sm:$0xff]
    %v136 = vld [vmem:[%s1 + $0x350] sm:$0xff]
    %v137 = vld [vmem:[%s1 + $0x358] sm:$0xff]
    %v138 = vld [vmem:[%s1 + $0x360] sm:$0xff]
    %v139 = vld [vmem:[%s1 + $0x368] sm:$0xff]
    %v140 = vld [vmem:[%s1 + $0x370] sm:$0xff]
    %v141 = vld [vmem:[%s1 + $0x378] sm:$0xff]
    %v142 = vld [vmem:[%s1 + $0x380] sm:$0xff]
    %v143 = vld [vmem:[%s1 + $0x388] sm:$0xff]
    %v144 = vld [vmem:[%s1 + $0x390] sm:$0xff]
    %v145 = vld [vmem:[%s1 + $0x398] sm:$0xff]
    %v146 = vld [vmem:[%s1 + $0x3a0] sm:$0xff]
    %v147 = vld [vmem:[%s1 + $0x3a8] sm:$0xff]
    %v148 = vld [vmem:[%s1 + $0x3b0] sm:$0xff]
    %v149 = vld [vmem:[%s1 + $0x3b8] sm:$0xff]
    %v150 = vld [vmem:[%s1 + $0x3c0] sm:$0xff]
    %v151 = vld [vmem:[%s1 + $0x3c8] sm:$0xff]
    %v152 = vld [vmem:[%s1 + $0x3d0] sm:$0xff]
    %v153 = vld [vmem:[%s1 + $0x3d8] sm:$0xff]
    %v154 = vld [vmem:[%s1 + $0x3e0] sm:$0xff]
    %v155 = vld [vmem:[%s1 + $0x3e8] sm:$0xff]
    %v156 = vld [vmem:[%s1 + $0x3f0] sm:$0xff]
    %v157 = vld [vmem:[%s1 + $0x3f8] sm:$0xff]
    %v158 = vld [vmem:[%s1 + $0x400] sm:$0xff]
    %v159 = vld [vmem:[%s1 + $0x408] sm:$0xff]
    %v160 = vld [vmem:[%s1 + $0x410] sm:$0xff]
    %v161 = vld [vmem:[%s1 + $0x418] sm:$0xff]
    %v162 = vld [vmem:[%s1 + $0x420] sm:$0xff]
    %v163 = vld [vmem:[%s1 + $0x428] sm:$0xff]
    %v164 = vld [vmem:[%s1 + $0x430] sm:$0xff]
    %v165 = vld [vmem:[%s1 + $0x438] sm:$0xff]
    %v166 = vld [vmem:[%s1 + $0x440] sm:$0xff]
    %v167 = vld [vmem:[%s1 + $0x448] sm:$0xff]
    %v168 = vld [vmem:[%s1 + $0x450] sm:$0xff]
    %v169 = vld [vmem:[%s1 + $0x458] sm:$0xff]
    %v170 = vld [vmem:[%s1 + $0x460] sm:$0xff]
    %v171 = vld [vmem:[%s1 + $0x468] sm:$0xff]
    %v172 = vld [vmem:[%s1 + $0x470] sm:$0xff]
    %v173 = vld [vmem:[%s1 + $0x478] sm:$0xff]
    %v174 = vld [vmem:[%s1 + $0x480] sm:$0xff]
    %v175 = vld [vmem:[%s1 + $0x488] sm:$0xff]
    %v176 = vld [vmem:[%s1 + $0x490] sm:$0xff]
    %v177 = vld [vmem:[%s1 + $0x498] sm:$0xff]
    %v178 = vld [vmem:[%s1 + $0x4a0] sm:$0xff]
    %v179 = vld [vmem:[%s1 + $0x4a8] sm:$0xff]
    %v180 = vld [vmem:[%s1 + $0x4b0] sm:$0xff]
    %v181 = vld [vmem:[%s1 + $0x4b8] sm:$0xff]
    %v182 = vld [vmem:[%s1 + $0x4c0] sm:$0xff]
    %v183 = vld [vmem:[%s1 + $0x4c8] sm:$0xff]
    %v184 = vld [vmem:[%s1 + $0x4d0] sm:$0xff]
    %v185 = vld [vmem:[%s1 + $0x4d8] sm:$0xff]
    %v186 = vld [vmem:[%s1 + $0x4e0] sm:$0xff]
    %v187 = vld [vmem:[%s1 + $0x4e8] sm:$0xff]
    %v188 = vld [vmem:[%s1 + $0x4f0] sm:$0xff]
    %v189 = vld [vmem:[%s1 + $0x4f8] sm:$0xff]
    %v190 = vld [vmem:[%s1 + $0x500] sm:$0xff]
    %v191 = vld [vmem:[%s1 + $0x508] sm:$0xff]
    %v192 = vld [vmem:[%s1 + $0x510] sm:$0xff]
    %v193 = vld [vmem:[%s1 + $0x518] sm:$0xff]
    %v194 = vld [vmem:[%s1 + $0x520] sm:$0xff]
    %v195 = vld [vmem:[%s1 + $0x528] sm:$0xff]
    %v196 = vld [vmem:[%s1 + $0x530] sm:$0xff]
    %v197 = vld [vmem:[%s1 + $0x538] sm:$0xff]
    %v198 = vld [vmem:[%s1 + $0x540] sm:$0xff]
    %v199 = vld [vmem:[%s1 + $0x548] sm:$0xff]
    %v200 = vld [vmem:[%s1 + $0x550] sm:$0xff]
    %v201 = vld [vmem:[%s1 + $0x558] sm:$0xff]
    %v202 = vld [vmem:[%s1 + $0x560] sm:$0xff]
    %v203 = vld [vmem:[%s1 + $0x568] sm:$0xff]
    %v204 = vld [vmem:[%s1 + $0x570] sm:$0xff]
    %v205 = vld [vmem:[%s1 + $0x578] sm:$0xff]
    %v206 = vld [vmem:[%s1 + $0x580] sm:$0xff]
    %v207 = vld [vmem:[%s1 + $0x588] sm:$0xff]
    %v208 = vld [vmem:[%s1 + $0x590] sm:$0xff]
    %v209 = vld [vmem:[%s1 + $0x598] sm:$0xff]
    %v210 = vld [vmem:[%s1 + $0x5a0] sm:$0xff]
    %v211 = vld [vmem:[%s1 + $0x5a8] sm:$0xff]
    %v212 = vld [vmem:[%s1 + $0x5b0] sm:$0xff]
    %v213 = vld [vmem:[%s1 + $0x5b8] sm:$0xff]
    %v214 = vld [vmem:[%s1 + $0x5c0] sm:$0xff]
    %v215 = vld [vmem:[%s1 + $0x5c8] sm:$0xff]
    %v216 = vld [vmem:[%s1 + $0x5d0] sm:$0xff]
    %v217 = vld [vmem:[%s1 + $0x5d8] sm:$0xff]
    %v218 = vld [vmem:[%s1 + $0x5e0] sm:$0xff]
    %v219 = vld [vmem:[%s1 + $0x5e8] sm:$0xff]
    %v220 = vld [vmem:[%s1 + $0x5f0] sm:$0xff]
    %v221 = vld [vmem:[%s1 + $0x5f8] sm:$0xff]
    %v222 = vld [vmem:[%s1 + $0x600] sm:$0xff]
    %v223 = vld [vmem:[%s1 + $0x608] sm:$0xff]
    %v224 = vld [vmem:[%s1 + $0x610] sm:$0xff]
    %v225 = vld [vmem:[%s1 + $0x618] sm:$0xff]
    %v226 = vld [vmem:[%s1 + $0x620] sm:$0xff]
    %v227 = vld [vmem:[%s1 + $0x628] sm:$0xff]
    %v228 = vld [vmem:[%s1 + $0x630] sm:$0xff]
    %v229 = vld [vmem:[%s1 + $0x638] sm:$0xff]
    %v230 = vld [vmem:[%s1 + $0x640] sm:$0xff]
    %v231 = vld [vmem:[%s1 + $0x648] sm:$0xff]
    %v232 = vld [vmem:[%s1 + $0x650] sm:$0xff]
    %v233 = vld [vmem:[%s1 + $0x658] sm:$0xff]
    %v234 = vld [vmem:[%s1 + $0x660] sm:$0xff]
    %v235 = vld [vmem:[%s1 + $0x668] sm:$0xff]
    %v236 = vld [vmem:[%s1 + $0x670] sm:$0xff]
    %v237 = vld [vmem:[%s1 + $0x678] sm:$0xff]
    %v238 = vld [vmem:[%s1 + $0x680] sm:$0xff]
    %v239 = vld [vmem:[%s1 + $0x688] sm:$0xff]
    %v240 = vld [vmem:[%s1 + $0x690] sm:$0xff]
    %v241 = vld [vmem:[%s1 + $0x698] sm:$0xff]
    %v242 = vld [vmem:[%s1 + $0x6a0] sm:$0xff]
    %v243 = vld [vmem:[%s1 + $0x6a8] sm:$0xff]
    %v244 = vld [vmem:[%s1 + $0x6b0] sm:$0xff]
    %v245 = vld [vmem:[%s1 + $0x6b8] sm:$0xff]
    %v246 = vld [vmem:[%s1 + $0x6c0] sm:$0xff]
    %v247 = vld [vmem:[%s1 + $0x6c8] sm:$0xff]
    %v248 = vld [vmem:[%s1 + $0x6d0] sm:$0xff]
    %v249 = vld [vmem:[%s1 + $0x6d8] sm:$0xff]
    %v250 = vld [vmem:[%s1 + $0x6e0] sm:$0xff]
    %v251 = vld [vmem:[%s1 + $0x6e8] sm:$0xff]
    %v252 = vld [vmem:[%s1 + $0x6f0] sm:$0xff]
    %v253 = vld [vmem:[%s1 + $0x6f8] sm:$0xff]
    %v254 = vld [vmem:[%s1 + $0x700] sm:$0xff]
    %v255 = vld [vmem:[%s1 + $0x708] sm:$0xff]
    %v256 = vld [vmem:[%s1 + $0x710] sm:$0xff]
    %v257 = vld [vmem:[%s1 + $0x718] sm:$0xff]
    %v258 = vld [vmem:[%s1 + $0x720] sm:$0xff]
    %v259 = vld [vmem:[%s1 + $0x728] sm:$0xff]
    %v260 = vld [vmem:[%s1 + $0x730] sm:$0xff]
    %v261 = vld [vmem:[%s1 + $0x738] sm:$0xff]
    %v262 = vld [vmem:[%s1 + $0x740] sm:$0xff]
    %v263 = vld [vmem:[%s1 + $0x748] sm:$0xff]
    %v264 = vld [vmem:[%s1 + $0x750] sm:$0xff]
    %v265 = vld [vmem:[%s1 + $0x758] sm:$0xff]
    %v266 = vld [vmem:[%s1 + $0x760] sm:$0xff]
    %v267 = vld [vmem:[%s1 + $0x768] sm:$0xff]
    %v268 = vld [vmem:[%s1 + $0x770] sm:$0xff]
    %v269 = vld [vmem:[%s1 + $0x778] sm:$0xff]
    %v270 = vld [vmem:[%s1 + $0x780] sm:$0xff]
    %v271 = vld [vmem:[%s1 + $0x788] sm:$0xff]
    %v272 = vld [vmem:[%s1 + $0x790] sm:$0xff]
    %v273 = vld [vmem:[%s1 + $0x798] sm:$0xff]
    %v274 = vld [vmem:[%s1 + $0x7a0] sm:$0xff]
    %v275 = vld [vmem:[%s1 + $0x7a8] sm:$0xff]
    %v276 = vld [vmem:[%s1 + $0x7b0] sm:$0xff]
    %v277 = vld [vmem:[%s1 + $0x7b8] sm:$0xff]
    %v278 = vld [vmem:[%s1 + $0x7c0] sm:$0xff]
    %v279 = vld [vmem:[%s1 + $0x7c8] sm:$0xff]
    %v280 = vld [vmem:[%s1 + $0x7d0] sm:$0xff]
    %v281 = vld [vmem:[%s1 + $0x7d8] sm:$0xff]
    %v282 = vld [vmem:[%s1 + $0x7e0] sm:$0xff]
    %v283 = vld [vmem:[%s1 + $0x7e8] sm:$0xff]
    %v284 = vld [vmem:[%s1 + $0x7f0] sm:$0xff]
    %v285 = vld [vmem:[%s1 + $0x7f8] sm:$0xff]
    %v286 = vld [vmem:[%s1 + $0x800] sm:$0xff]
    %v287 = vld [vmem:[%s1 + $0x808] sm:$0xff]
    %v288 = vld [vmem:[%s1 + $0x810] sm:$0xff]
    %v289 = vld [vmem:[%s1 + $0x818] sm:$0xff]
    %v290 = vld [vmem:[%s1 + $0x820] sm:$0xff]
    %v291 = vld [vmem:[%s1 + $0x828] sm:$0xff]
    %v292 = vld [vmem:[%s1 + $0x830] sm:$0xff]
    %v293 = vld [vmem:[%s1 + $0x838] sm:$0xff]
    %v294 = vld [vmem:[%s1 + $0x840] sm:$0xff]
    %v295 = vld [vmem:[%s1 + $0x848] sm:$0xff]
    %v296 = vld [vmem:[%s1 + $0x850] sm:$0xff]
    %v297 = vld [vmem:[%s1 + $0x858] sm:$0xff]
    %v298 = vld [vmem:[%s1 + $0x860] sm:$0xff]
    %v299 = vld [vmem:[%s1 + $0x868] sm:$0xff]
    %v300 = vld [vmem:[%s1 + $0x870] sm:$0xff]
    %v301 = vld [vmem:[%s1 + $0x878] sm:$0xff]
    %v302 = vld [vmem:[%s1 + $0x880] sm:$0xff]
    %v303 = vld [vmem:[%s1 + $0x888] sm:$0xff]
    %v304 = vld [vmem:[%s1 + $0x890] sm:$0xff]
    %v305 = vld [vmem:[%s1 + $0x898] sm:$0xff]
    %v306 = vld [vmem:[%s1 + $0x8a0] sm:$0xff]
    %v307 = vld [vmem:[%s1 + $0x8a8] sm:$0xff]
    %v308 = vld [vmem:[%s1 + $0x8b0] sm:$0xff]
    %v309 = vld [vmem:[%s1 + $0x8b8] sm:$0xff]
    %v310 = vld [vmem:[%s1 + $0x8c0] sm:$0xff]
    %v311 = vld [vmem:[%s1 + $0x8c8] sm:$0xff]
    %v312 = vld [vmem:[%s1 + $0x8d0] sm:$0xff]
    %v313 = vld [vmem:[%s1 + $0x8d8] sm:$0xff]
    %v314 = vld [vmem:[%s1 + $0x8e0] sm:$0xff]
    %v315 = vld [vmem:[%s1 + $0x8e8] sm:$0xff]
    %v316 = vld [vmem:[%s1 + $0x8f0] sm:$0xff]
    %v317 = vld [vmem:[%s1 + $0x8f8] sm:$0xff]
    %v318 = vld [vmem:[%s1 + $0x900] sm:$0xff]
    %v319 = vld [vmem:[%s1 + $0x908] sm:$0xff]
    %v320 = vld [vmem:[%s1 + $0x910] sm:$0xff]
    %v321 = vld [vmem:[%s1 + $0x918] sm:$0xff]
    %v322 = vld [vmem:[%s1 + $0x920] sm:$0xff]
    %v323 = vld [vmem:[%s1 + $0x928] sm:$0xff]
    %v324 = vld [vmem:[%s1 + $0x930] sm:$0xff]
    %v325 = vld [vmem:[%s1 + $0x938] sm:$0xff]
    %v326 = vld [vmem:[%s1 + $0x940] sm:$0xff]
    %v327 = vld [vmem:[%s1 + $0x948] sm:$0xff]
    %v328 = vld [vmem:[%s1 + $0x950] sm:$0xff]
    %v329 = vld [vmem:[%s1 + $0x958] sm:$0xff]
    %v330 = vld [vmem:[%s1 + $0x960] sm:$0xff]
    %v331 = vld [vmem:[%s1 + $0x968] sm:$0xff]
    %v332 = vld [vmem:[%s1 + $0x970] sm:$0xff]
    %v333 = vld [vmem:[%s1 + $0x978] sm:$0xff]
    %v334 = vld [vmem:[%s1 + $0x980] sm:$0xff]
    %v335 = vld [vmem:[%s1 + $0x988] sm:$0xff]
    %v336 = vld [vmem:[%s1 + $0x990] sm:$0xff]
    %v337 = vld [vmem:[%s1 + $0x998] sm:$0xff]
    %v338 = vld [vmem:[%s1 + $0x9a0] sm:$0xff]
    %v339 = vld [vmem:[%s1 + $0x9a8] sm:$0xff]
    %v340 = vld [vmem:[%s1 + $0x9b0] sm:$0xff]
    %v341 = vld [vmem:[%s1 + $0x9b8] sm:$0xff]
    %v342 = vld [vmem:[%s1 + $0x9c0] sm:$0xff]
    %v343 = vld [vmem:[%s1 + $0x9c8] sm:$0xff]
    %v344 = vld [vmem:[%s1 + $0x9d0] sm:$0xff]
    %v345 = vld [vmem:[%s1 + $0x9d8] sm:$0xff]
    %v346 = vld [vmem:[%s1 + $0x9e0] sm:$0xff]
    %v347 = vld [vmem:[%s1 + $0x9e8] sm:$0xff]
    %v348 = vld [vmem:[%s1 + $0x9f0] sm:$0xff]
    %v349 = vld [vmem:[%s1 + $0x9f8] sm:$0xff]
    %v350 = vld [vmem:[%s1 + $0xa00] sm:$0xff]
    %v351 = vld [vmem:[%s1 + $0xa08] sm:$0xff]
    %v352 = vld [vmem:[%s1 + $0xa10] sm:$0xff]
    %v353 = vld [vmem:[%s1 + $0xa18] sm:$0xff]
    %v354 = vld [vmem:[%s1 + $0xa20] sm:$0xff]
    %v355 = vld [vmem:[%s1 + $0xa28] sm:$0xff]
    %v356 = vld [vmem:[%s1 + $0xa30] sm:$0xff]
    %v357 = vld [vmem:[%s1 + $0xa38] sm:$0xff]
    %v358 = vld [vmem:[%s1 + $0xa40] sm:$0xff]
    %v359 = vld [vmem:[%s1 + $0xa48] sm:$0xff]
    %v360 = vld [vmem:[%s1 + $0xa50] sm:$0xff]
    %v361 = vld [vmem:[%s1 + $0xa58] sm:$0xff]
    %v362 = vld [vmem:[%s1 + $0xa60] sm:$0xff]
    %v363 = vld [vmem:[%s1 + $0xa68] sm:$0xff]
    %v364 = vld [vmem:[%s1 + $0xa70] sm:$0xff]
    %v365 = vld [vmem:[%s1 + $0xa78] sm:$0xff]
    %v366 = vld [vmem:[%s1 + $0xa80] sm:$0xff]
    %v367 = vld [vmem:[%s1 + $0xa88] sm:$0xff]
    %v368 = vld [vmem:[%s1 + $0xa90] sm:$0xff]
    %v369 = vld [vmem:[%s1 + $0xa98] sm:$0xff]
    %v370 = vld [vmem:[%s1 + $0xaa0] sm:$0xff]
    %v371 = vld [vmem:[%s1 + $0xaa8] sm:$0xff]
    %v372 = vld [vmem:[%s1 + $0xab0] sm:$0xff]
    %v373 = vld [vmem:[%s1 + $0xab8] sm:$0xff]
    %v374 = vld [vmem:[%s1 + $0xac0] sm:$0xff]
    %v375 = vld [vmem:[%s1 + $0xac8] sm:$0xff]
    %v376 = vld [vmem:[%s1 + $0xad0] sm:$0xff]
    %v377 = vld [vmem:[%s1 + $0xad8] sm:$0xff]
    %v378 = vld [vmem:[%s1 + $0xae0] sm:$0xff]
    %v379 = vld [vmem:[%s1 + $0xae8] sm:$0xff]
    %v380 = vld [vmem:[%s1 + $0xaf0] sm:$0xff]
    %v381 = vld [vmem:[%s1 + $0xaf8] sm:$0xff]
    %v382 = vld [vmem:[%s1 + $0xb00] sm:$0xff]
    %v383 = vld [vmem:[%s1 + $0xb08] sm:$0xff]
    %v384 = vld [vmem:[%s1 + $0xb10] sm:$0xff]
    %v385 = vld [vmem:[%s1 + $0xb18] sm:$0xff]
    %v386 = vld [vmem:[%s1 + $0xb20] sm:$0xff]
    %v387 = vld [vmem:[%s1 + $0xb28] sm:$0xff]
    %v388 = vld [vmem:[%s1 + $0xb30] sm:$0xff]
    %v389 = vld [vmem:[%s1 + $0xb38] sm:$0xff]
    %v390 = vld [vmem:[%s1 + $0xb40] sm:$0xff]
    %v391 = vld [vmem:[%s1 + $0xb48] sm:$0xff]
    %v392 = vld [vmem:[%s1 + $0xb50] sm:$0xff]
    %v393 = vld [vmem:[%s1 + $0xb58] sm:$0xff]
    %v394 = vld [vmem:[%s1 + $0xb60] sm:$0xff]
    %v395 = vld [vmem:[%s1 + $0xb68] sm:$0xff]
    %v396 = vld [vmem:[%s1 + $0xb70] sm:$0xff]
    %v397 = vld [vmem:[%s1 + $0xb78] sm:$0xff]
    %v398 = vld [vmem:[%s1 + $0xb80] sm:$0xff]
    %v399 = vld [vmem:[%s1 + $0xb88] sm:$0xff]
    %v400 = vld [vmem:[%s1 + $0xb90] sm:$0xff]
    %v401 = vld [vmem:[%s1 + $0xb98] sm:$0xff]
    %v402 = vld [vmem:[%s1 + $0xba0] sm:$0xff]
    %v403 = vld [vmem:[%s1 + $0xba8] sm:$0xff]
    %v404 = vld [vmem:[%s1 + $0xbb0] sm:$0xff]
    %v405 = vld [vmem:[%s1 + $0xbb8] sm:$0xff]
    %v406 = vld [vmem:[%s1 + $0xbc0] sm:$0xff]
    %v407 = vld [vmem:[%s1 + $0xbc8] sm:$0xff]
    %v408 = vld [vmem:[%s1 + $0xbd0] sm:$0xff]
    %v409 = vld [vmem:[%s1 + $0xbd8] sm:$0xff]
    %v410 = vld [vmem:[%s1 + $0xbe0] sm:$0xff]
    %v411 = vld [vmem:[%s1 + $0xbe8] sm:$0xff]
    %v412 = vld [vmem:[%s1 + $0xbf0] sm:$0xff]
    %v413 = vld [vmem:[%s1 + $0xbf8] sm:$0xff]
    %v414 = vld [vmem:[%s1 + $0xc00] sm:$0xff]
    %v415 = vld [vmem:[%s1 + $0xc08] sm:$0xff]
    %v416 = vld [vmem:[%s1 + $0xc10] sm:$0xff]
    %v417 = vld [vmem:[%s1 + $0xc18] sm:$0xff]
    %v418 = vld [vmem:[%s1 + $0xc20] sm:$0xff]
    %v419 = vld [vmem:[%s1 + $0xc28] sm:$0xff]
    %v420 = vld [vmem:[%s1 + $0xc30] sm:$0xff]
    %v421 = vld [vmem:[%s1 + $0xc38] sm:$0xff]
    %v422 = vld [vmem:[%s1 + $0xc40] sm:$0xff]
    %v423 = vld [vmem:[%s1 + $0xc48] sm:$0xff]
    %v424 = vld [vmem:[%s1 + $0xc50] sm:$0xff]
    %v425 = vld [vmem:[%s1 + $0xc58] sm:$0xff]
    %v426 = vld [vmem:[%s1 + $0xc60] sm:$0xff]
    %v427 = vld [vmem:[%s1 + $0xc68] sm:$0xff]
    %v428 = vld [vmem:[%s1 + $0xc70] sm:$0xff]
    %v429 = vld [vmem:[%s1 + $0xc78] sm:$0xff]
    %v430 = vld [vmem:[%s1 + $0xc80] sm:$0xff]
    %v431 = vld [vmem:[%s1 + $0xc88] sm:$0xff]
    %v432 = vld [vmem:[%s1 + $0xc90] sm:$0xff]
    %v433 = vld [vmem:[%s1 + $0xc98] sm:$0xff]
    %v434 = vld [vmem:[%s1 + $0xca0] sm:$0xff]
    %v435 = vld [vmem:[%s1 + $0xca8] sm:$0xff]
    %v436 = vld [vmem:[%s1 + $0xcb0] sm:$0xff]
    %v437 = vld [vmem:[%s1 + $0xcb8] sm:$0xff]
    %v438 = vld [vmem:[%s1 + $0xcc0] sm:$0xff]
    %v439 = vld [vmem:[%s1 + $0xcc8] sm:$0xff]
    %v440 = vld [vmem:[%s1 + $0xcd0] sm:$0xff]
    %v441 = vld [vmem:[%s1 + $0xcd8] sm:$0xff]
    %v442 = vld [vmem:[%s1 + $0xce0] sm:$0xff]
    %v443 = vld [vmem:[%s1 + $0xce8] sm:$0xff]
    %v444 = vld [vmem:[%s1 + $0xcf0] sm:$0xff]
    %v445 = vld [vmem:[%s1 + $0xcf8] sm:$0xff]
    %v446 = vld [vmem:[%s1 + $0xd00] sm:$0xff]
    %v447 = vld [vmem:[%s1 + $0xd08] sm:$0xff]
    %v448 = vld [vmem:[%s1 + $0xd10] sm:$0xff]
    %v449 = vld [vmem:[%s1 + $0xd18] sm:$0xff]
    %v450 = vld [vmem:[%s1 + $0xd20] sm:$0xff]
    %v451 = vld [vmem:[%s1 + $0xd28] sm:$0xff]
    %v452 = vld [vmem:[%s1 + $0xd30] sm:$0xff]
    %v453 = vld [vmem:[%s1 + $0xd38] sm:$0xff]
    %v454 = vld [vmem:[%s1 + $0xd40] sm:$0xff]
    %v455 = vld [vmem:[%s1 + $0xd48] sm:$0xff]
    %v456 = vld [vmem:[%s1 + $0xd50] sm:$0xff]
    %v457 = vld [vmem:[%s1 + $0xd58] sm:$0xff]
    %v458 = vld [vmem:[%s1 + $0xd60] sm:$0xff]
    %v459 = vld [vmem:[%s1 + $0xd68] sm:$0xff]
    %v460 = vld [vmem:[%s1 + $0xd70] sm:$0xff]
    %v461 = vld [vmem:[%s1 + $0xd78] sm:$0xff]
    %v462 = vld [vmem:[%s1 + $0xd80] sm:$0xff]
    %v463 = vld [vmem:[%s1 + $0xd88] sm:$0xff]
    %v464 = vld [vmem:[%s1 + $0xd90] sm:$0xff]
    %v465 = vld [vmem:[%s1 + $0xd98] sm:$0xff]
    %v466 = vld [vmem:[%s1 + $0xda0] sm:$0xff]
    %v467 = vld [vmem:[%s1 + $0xda8] sm:$0xff]
    %v468 = vld [vmem:[%s1 + $0xdb0] sm:$0xff]
    %v469 = vld [vmem:[%s1 + $0xdb8] sm:$0xff]
    %v470 = vld [vmem:[%s1 + $0xdc0] sm:$0xff]
    %v471 = vld [vmem:[%s1 + $0xdc8] sm:$0xff]
    %v472 = vld [vmem:[%s1 + $0xdd0] sm:$0xff]
    %v473 = vld [vmem:[%s1 + $0xdd8] sm:$0xff]
    %v474 = vld [vmem:[%s1 + $0xde0] sm:$0xff]
    %v475 = vld [vmem:[%s1 + $0xde8] sm:$0xff]
    %v476 = vld [vmem:[%s1 + $0xdf0] sm:$0xff]
    %v477 = vld [vmem:[%s1 + $0xdf8] sm:$0xff]
    %v478 = vld [vmem:[%s1 + $0xe00] sm:$0xff]
    %v479 = vld [vmem:[%s1 + $0xe08] sm:$0xff]
    %v480 = vld [vmem:[%s1 + $0xe10] sm:$0xff]
    %v481 = vld [vmem:[%s1 + $0xe18] sm:$0xff]
    %v482 = vld [vmem:[%s1 + $0xe20] sm:$0xff]
    %v483 = vld [vmem:[%s1 + $0xe28] sm:$0xff]
    %v484 = vld [vmem:[%s1 + $0xe30] sm:$0xff]
    %v485 = vld [vmem:[%s1 + $0xe38] sm:$0xff]
    %v486 = vld [vmem:[%s1 + $0xe40] sm:$0xff]
    %v487 = vld [vmem:[%s1 + $0xe48] sm:$0xff]
    %v488 = vld [vmem:[%s1 + $0xe50] sm:$0xff]
    %v489 = vld [vmem:[%s1 + $0xe58] sm:$0xff]
    %v490 = vld [vmem:[%s1 + $0xe60] sm:$0xff]
    %v491 = vld [vmem:[%s1 + $0xe68] sm:$0xff]
    %v492 = vld [vmem:[%s1 + $0xe70] sm:$0xff]
    %v493 = vld [vmem:[%s1 + $0xe78] sm:$0xff]
    %v494 = vld [vmem:[%s1 + $0xe80] sm:$0xff]
    %v495 = vld [vmem:[%s1 + $0xe88] sm:$0xff]
    %v496 = vld [vmem:[%s1 + $0xe90] sm:$0xff]
    %v497 = vld [vmem:[%s1 + $0xe98] sm:$0xff]
    %v498 = vld [vmem:[%s1 + $0xea0] sm:$0xff]
    %v499 = vld [vmem:[%s1 + $0xea8] sm:$0xff]
    %v500 = vld [vmem:[%s1 + $0xeb0] sm:$0xff]
    %v501 = vld [vmem:[%s1 + $0xeb8] sm:$0xff]
    %v502 = vld [vmem:[%s1 + $0xec0] sm:$0xff]
    %v503 = vld [vmem:[%s1 + $0xec8] sm:$0xff]
    %v504 = vld [vmem:[%s1 + $0xed0] sm:$0xff]
    %v505 = vld [vmem:[%s1 + $0xed8] sm:$0xff]
    %v506 = vld [vmem:[%s1 + $0xee0] sm:$0xff]
    %v507 = vld [vmem:[%s1 + $0xee8] sm:$0xff]
    %v508 = vld [vmem:[%s1 + $0xef0] sm:$0xff]
    %v509 = vld [vmem:[%s1 + $0xef8] sm:$0xff]
    %v510 = vld [vmem:[%s1 + $0xf00] sm:$0xff]
    %v511 = vld [vmem:[%s1 + $0xf08] sm:$0xff]
    %v512 = vld [vmem:[%s1 + $0xf10] sm:$0xff]
    %v513 = vld [vmem:[%s1 + $0xf18] sm:$0xff]
    %v514 = vld [vmem:[%s1 + $0xf20] sm:$0xff]
    %v515 = vld [vmem:[%s1 + $0xf28] sm:$0xff]
    %v516 = vld [vmem:[%s1 + $0xf30] sm:$0xff]
    %v517 = vld [vmem:[%s1 + $0xf38] sm:$0xff]
    %v518 = vld [vmem:[%s1 + $0xf40] sm:$0xff]
    %v519 = vld [vmem:[%s1 + $0xf48] sm:$0xff]
    %v520 = vld [vmem:[%s1 + $0xf50] sm:$0xff]
    %v521 = vld [vmem:[%s1 + $0xf58] sm:$0xff]
    %v522 = vld [vmem:[%s1 + $0xf60] sm:$0xff]
    %v523 = vld [vmem:[%s1 + $0xf68] sm:$0xff]
    %v524 = vld [vmem:[%s1 + $0xf70] sm:$0xff]
    %v525 = vld [vmem:[%s1 + $0xf78] sm:$0xff]
    %v526 = vld [vmem:[%s1 + $0xf80] sm:$0xff]
    %v527 = vld [vmem:[%s1 + $0xf88] sm:$0xff]
    %v528 = vld [vmem:[%s1 + $0xf90] sm:$0xff]
    %v529 = vld [vmem:[%s1 + $0xf98] sm:$0xff]
    %v530 = vld [vmem:[%s1 + $0xfa0] sm:$0xff]
    %v531 = vld [vmem:[%s1 + $0xfa8] sm:$0xff]
    %v532 = vld [vmem:[%s1 + $0xfb0] sm:$0xff]
    %v533 = vld [vmem:[%s1 + $0xfb8] sm:$0xff]
    %v534 = vld [vmem:[%s1 + $0xfc0] sm:$0xff]
    %v535 = vld [vmem:[%s1 + $0xfc8] sm:$0xff]
    %v536 = vld [vmem:[%s1 + $0xfd0] sm:$0xff]
    %v537 = vld [vmem:[%s1 + $0xfd8] sm:$0xff]
    %v538 = vld [vmem:[%s1 + $0xfe0] sm:$0xff]
    %v539 = vld [vmem:[%s1 + $0xfe8] sm:$0xff]
    %v540 = vld [vmem:[%s1 + $0xff0] sm:$0xff]
    %v541 = vld [vmem:[%s1 + $0xff8] sm:$0xff]
    %v542 = vld [vmem:[%s1 + $0x1000] sm:$0xff]
    %v543 = vld [vmem:[%s1 + $0x1008] sm:$0xff]
    %v544 = vld [vmem:[%s1 + $0x1010] sm:$0xff]
    %v545 = vld [vmem:[%s1 + $0x1018] sm:$0xff]
    %v546 = vld [vmem:[%s1 + $0x1020] sm:$0xff]
    %v547 = vld [vmem:[%s1 + $0x1028] sm:$0xff]
    %v548 = vld [vmem:[%s1 + $0x1030] sm:$0xff]
    %v549 = vld [vmem:[%s1 + $0x1038] sm:$0xff]
    %v550 = vld [vmem:[%s1 + $0x1040] sm:$0xff]
    %v551 = vld [vmem:[%s1 + $0x1048] sm:$0xff]
    %v552 = vld [vmem:[%s1 + $0x1050] sm:$0xff]
    %v553 = vld [vmem:[%s1 + $0x1058] sm:$0xff]
    %v554 = vld [vmem:[%s1 + $0x1060] sm:$0xff]
    %v555 = vld [vmem:[%s1 + $0x1068] sm:$0xff]
    %v556 = vld [vmem:[%s1 + $0x1070] sm:$0xff]
    %v557 = vld [vmem:[%s1 + $0x1078] sm:$0xff]
    %v558 = vld [vmem:[%s1 + $0x1080] sm:$0xff]
    %v559 = vld [vmem:[%s1 + $0x1088] sm:$0xff]
    %v560 = vld [vmem:[%s1 + $0x1090] sm:$0xff]
    %v561 = vld [vmem:[%s1 + $0x1098] sm:$0xff]
    %v562 = vld [vmem:[%s1 + $0x10a0] sm:$0xff]
    %v563 = vld [vmem:[%s1 + $0x10a8] sm:$0xff]
    %v564 = vld [vmem:[%s1 + $0x10b0] sm:$0xff]
    %v565 = vld [vmem:[%s1 + $0x10b8] sm:$0xff]
    %v566 = vld [vmem:[%s1 + $0x10c0] sm:$0xff]
    %v567 = vld [vmem:[%s1 + $0x10c8] sm:$0xff]
    %v568 = vld [vmem:[%s1 + $0x10d0] sm:$0xff]
    %v569 = vld [vmem:[%s1 + $0x10d8] sm:$0xff]
    %v570 = vld [vmem:[%s1 + $0x10e0] sm:$0xff]
    %v571 = vld [vmem:[%s1 + $0x10e8] sm:$0xff]
    %v572 = vld [vmem:[%s1 + $0x10f0] sm:$0xff]
    %v573 = vld [vmem:[%s1 + $0x10f8] sm:$0xff]
    %v574 = vld [vmem:[%s1 + $0x1100] sm:$0xff]
    %v575 = vld [vmem:[%s1 + $0x1108] sm:$0xff]
    %v576 = vld [vmem:[%s1 + $0x1110] sm:$0xff]
    %v577 = vld [vmem:[%s1 + $0x1118] sm:$0xff]
    %v578 = vld [vmem:[%s1 + $0x1120] sm:$0xff]
    %v579 = vld [vmem:[%s1 + $0x1128] sm:$0xff]
    %v580 = vld [vmem:[%s1 + $0x1130] sm:$0xff]
    %v581 = vld [vmem:[%s1 + $0x1138] sm:$0xff]
    %v582 = vld [vmem:[%s1 + $0x1140] sm:$0xff]
    %v583 = vld [vmem:[%s1 + $0x1148] sm:$0xff]
    %v584 = vld [vmem:[%s1 + $0x1150] sm:$0xff]
    %v585 = vld [vmem:[%s1 + $0x1158] sm:$0xff]
    %v586 = vld [vmem:[%s1 + $0x1160] sm:$0xff]
    %v587 = vld [vmem:[%s1 + $0x1168] sm:$0xff]
    %v588 = vld [vmem:[%s1 + $0x1170] sm:$0xff]
    %v589 = vld [vmem:[%s1 + $0x1178] sm:$0xff]
    %v590 = vld [vmem:[%s1 + $0x1180] sm:$0xff]
    %v591 = vld [vmem:[%s1 + $0x1188] sm:$0xff]
    %v592 = vld [vmem:[%s1 + $0x1190] sm:$0xff]
    %v593 = vld [vmem:[%s1 + $0x1198] sm:$0xff]
    %v594 = vld [vmem:[%s1 + $0x11a0] sm:$0xff]
    %v595 = vld [vmem:[%s1 + $0x11a8] sm:$0xff]
    %v596 = vld [vmem:[%s1 + $0x11b0] sm:$0xff]
    %v597 = vld [vmem:[%s1 + $0x11b8] sm:$0xff]
    %v598 = vld [vmem:[%s1 + $0x11c0] sm:$0xff]
    %v599 = vld [vmem:[%s1 + $0x11c8] sm:$0xff]
    %v600 = vld [vmem:[%s1 + $0x11d0] sm:$0xff]
    %v601 = vld [vmem:[%s1 + $0x11d8] sm:$0xff]
    %v602 = vld [vmem:[%s1 + $0x11e0] sm:$0xff]
    %v603 = vld [vmem:[%s1 + $0x11e8] sm:$0xff]
    %v604 = vld [vmem:[%s1 + $0x11f0] sm:$0xff]
    %v605 = vld [vmem:[%s1 + $0x11f8] sm:$0xff]
    %v606 = vld [vmem:[%s2] sm:$0x1]
    %v608 = vperm.slane %v606, 0
    %619 = vst [vmem:[#allocation1] ss:$4 sm:$0xff] %v21
    %s620 = scalar_lea.vmem [#allocation1], 32
    %621 = vst [vmem:[%s620] ss:$4 sm:$0xff] %v22
    %v622 = vld.sshfl [vmem:[#allocation1] sm:$0xff pattern:$0x73625140]
    %v623 = vld.sshfl [vmem:[#allocation1 + $0x8] sm:$0xff pattern:$0x73625140]
    %v624 = vld.sshfl [vmem:[#allocation1 + $0x10] sm:$0xff pattern:$0x73625140]
    %v625 = vld.sshfl [vmem:[#allocation1 + $0x18] sm:$0xff pattern:$0x73625140]
    %v626 = vld.sshfl [vmem:[#allocation1 + $0x20] sm:$0xff pattern:$0x73625140]
    %v627 = vld.sshfl [vmem:[#allocation1 + $0x28] sm:$0xff pattern:$0x73625140]
    %v628 = vld.sshfl [vmem:[#allocation1 + $0x30] sm:$0xff pattern:$0x73625140]
    %v629 = vld.sshfl [vmem:[#allocation1 + $0x38] sm:$0xff pattern:$0x73625140]
    %630 = vst [vmem:[#allocation1] ss:$4 sm:$0xff] %v23
    %631 = vst [vmem:[%s620] ss:$4 sm:$0xff] %v24
    %v632 = vld.sshfl [vmem:[#allocation1] sm:$0xff pattern:$0x73625140]
    %v633 = vld.sshfl [vmem:[#allocation1 + $0x8] sm:$0xff pattern:$0x73625140]
    %v634 = vld.sshfl [vmem:[#allocation1 + $0x10] sm:$0xff pattern:$0x73625140]
    %v635 = vld.sshfl [vmem:[#allocation1 + $0x18] sm:$0xff pattern:$0x73625140]
    %v636 = vld.sshfl [vmem:[#allocation1 + $0x20] sm:$0xff pattern:$0x73625140]
    %v637 = vld.sshfl [vmem:[#allocation1 + $0x28] sm:$0xff pattern:$0x73625140]
    %v638 = vld.sshfl [vmem:[#allocation1 + $0x30] sm:$0xff pattern:$0x73625140]
    %v639 = vld.sshfl [vmem:[#allocation1 + $0x38] sm:$0xff pattern:$0x73625140]
    %640 = vst [vmem:[#allocation1] ss:$4 sm:$0xff] %v25
    %641 = vst [vmem:[%s620] ss:$4 sm:$0xff] %v26
    %v642 = vld.sshfl [vmem:[#allocation1] sm:$0xff pattern:$0x73625140]
    %v643 = vld.sshfl [vmem:[#allocation1 + $0x8] sm:$0xff pattern:$0x73625140]
    %v644 = vld.sshfl [vmem:[#allocation1 + $0x10] sm:$0xff pattern:$0x73625140]
    %v645 = vld.sshfl [vmem:[#allocation1 + $0x18] sm:$0xff pattern:$0x73625140]
    %v646 = vld.sshfl [vmem:[#allocation1 + $0x20] sm:$0xff pattern:$0x73625140]
    %v647 = vld.sshfl [vmem:[#allocation1 + $0x28] sm:$0xff pattern:$0x73625140]
    %v648 = vld.sshfl [vmem:[#allocation1 + $0x30] sm:$0xff pattern:$0x73625140]
    %v649 = vld.sshfl [vmem:[#allocation1 + $0x38] sm:$0xff pattern:$0x73625140]
    %650 = vst [vmem:[#allocation1] ss:$4 sm:$0xff] %v27
    %651 = vst [vmem:[%s620] ss:$4 sm:$0xff] %v28
    %v652 = vld.sshfl [vmem:[#allocation1] sm:$0xff pattern:$0x73625140]
    %v653 = vld.sshfl [vmem:[#allocation1 + $0x8] sm:$0xff pattern:$0x73625140]
    %v654 = vld.sshfl [vmem:[#allocation1 + $0x10] sm:$0xff pattern:$0x73625140]
    %v655 = vld.sshfl [vmem:[#allocation1 + $0x18] sm:$0xff pattern:$0x73625140]
    %v656 = vld.sshfl [vmem:[#allocation1 + $0x20] sm:$0xff pattern:$0x73625140]
    %v657 = vld.sshfl [vmem:[#allocation1 + $0x28] sm:$0xff pattern:$0x73625140]
    %v658 = vld.sshfl [vmem:[#allocation1 + $0x30] sm:$0xff pattern:$0x73625140]
    %v659 = vld.sshfl [vmem:[#allocation1 + $0x38] sm:$0xff pattern:$0x73625140]
    %660 = vst [vmem:[#allocation1] ss:$4 sm:$0xff] %v29
    %v661 = vld.sshfl [vmem:[#allocation1] sm:$0xff pattern:$0x73625140]
    %v662 = vld.sshfl [vmem:[#allocation1 + $0x8] sm:$0xff pattern:$0x73625140]
    %v663 = vld.sshfl [vmem:[#allocation1 + $0x10] sm:$0xff pattern:$0x73625140]
    %v664 = vld.sshfl [vmem:[#allocation1 + $0x18] sm:$0xff pattern:$0x73625140]
    %701 = vmatpush.msra.mxu0 %v45
    %702 = vmatpush.msra.mxu0 %v44
    %703 = vmatpush.msra.mxu0 %v43
    %704 = vmatpush.msra.mxu0 %v42
    %705 = vmatpush.msra.mxu0 %v41
    %706 = vmatpush.msra.mxu0 %v40
    %707 = vmatpush.msra.mxu0 %v39
    %708 = vmatpush.msra.mxu0 %v38
    %709 = vmatpush.msra.mxu0 %v37
    %710 = vmatpush.msra.mxu0 %v36
    %711 = vmatpush.msra.mxu0 %v35
    %712 = vmatpush.msra.mxu0 %v34
    %713 = vmatpush.msra.mxu0 %v33
    %714 = vmatpush.msra.mxu0 %v32
    %715 = vmatpush.msra.mxu0 %v31
    %716 = vmatpush.msra.mxu0 %v30
    %717 = vmatmul.f32.gmra.mxu0 %v622
    %v718 = vpop.f32.mrf.mxu0
    %v719 = vadd.f32 %v608, %v718
    %720 = vdwg.mxu0
    %721 = vmatpush.msra.mxu0 %v61
    %722 = vmatpush.msra.mxu0 %v60
    %723 = vmatpush.msra.mxu0 %v59
    %724 = vmatpush.msra.mxu0 %v58
    %725 = vmatpush.msra.mxu0 %v57
    %726 = vmatpush.msra.mxu0 %v56
    %727 = vmatpush.msra.mxu0 %v55
    %728 = vmatpush.msra.mxu0 %v54
    %729 = vmatpush.msra.mxu0 %v53
    %730 = vmatpush.msra.mxu0 %v52
    %731 = vmatpush.msra.mxu0 %v51
    %732 = vmatpush.msra.mxu0 %v50
    %733 = vmatpush.msra.mxu0 %v49
    %734 = vmatpush.msra.mxu0 %v48
    %735 = vmatpush.msra.mxu0 %v47
    %736 = vmatpush.msra.mxu0 %v46
    %737 = vmatmul.f32.gmra.mxu0 %v623
    %v738 = vpop.f32.mrf.mxu0
    %v739 = vadd.f32 %v719, %v738
    %740 = vdwg.mxu0
    %741 = vmatpush.msra.mxu0 %v77
    %742 = vmatpush.msra.mxu0 %v76
    %743 = vmatpush.msra.mxu0 %v75
    %744 = vmatpush.msra.mxu0 %v74
    %745 = vmatpush.msra.mxu0 %v73
    %746 = vmatpush.msra.mxu0 %v72
    %747 = vmatpush.msra.mxu0 %v71
    %748 = vmatpush.msra.mxu0 %v70
    %749 = vmatpush.msra.mxu0 %v69
    %750 = vmatpush.msra.mxu0 %v68
    %751 = vmatpush.msra.mxu0 %v67
    %752 = vmatpush.msra.mxu0 %v66
    %753 = vmatpush.msra.mxu0 %v65
    %754 = vmatpush.msra.mxu0 %v64
    %755 = vmatpush.msra.mxu0 %v63
    %756 = vmatpush.msra.mxu0 %v62
    %757 = vmatmul.f32.gmra.mxu0 %v624
    %v758 = vpop.f32.mrf.mxu0
    %v759 = vadd.f32 %v739, %v758
    %760 = vdwg.mxu0
    %761 = vmatpush.msra.mxu0 %v93
    %762 = vmatpush.msra.mxu0 %v92
    %763 = vmatpush.msra.mxu0 %v91
    %764 = vmatpush.msra.mxu0 %v90
    %765 = vmatpush.msra.mxu0 %v89
    %766 = vmatpush.msra.mxu0 %v88
    %767 = vmatpush.msra.mxu0 %v87
    %768 = vmatpush.msra.mxu0 %v86
    %769 = vmatpush.msra.mxu0 %v85
    %770 = vmatpush.msra.mxu0 %v84
    %771 = vmatpush.msra.mxu0 %v83
    %772 = vmatpush.msra.mxu0 %v82
    %773 = vmatpush.msra.mxu0 %v81
    %774 = vmatpush.msra.mxu0 %v80
    %775 = vmatpush.msra.mxu0 %v79
    %776 = vmatpush.msra.mxu0 %v78
    %777 = vmatmul.f32.gmra.mxu0 %v625
    %v778 = vpop.f32.mrf.mxu0
    %v779 = vadd.f32 %v759, %v778
    %780 = vdwg.mxu0
    %781 = vmatpush.msra.mxu0 %v109
    %782 = vmatpush.msra.mxu0 %v108
    %783 = vmatpush.msra.mxu0 %v107
    %784 = vmatpush.msra.mxu0 %v106
    %785 = vmatpush.msra.mxu0 %v105
    %786 = vmatpush.msra.mxu0 %v104
    %787 = vmatpush.msra.mxu0 %v103
    %788 = vmatpush.msra.mxu0 %v102
    %789 = vmatpush.msra.mxu0 %v101
    %790 = vmatpush.msra.mxu0 %v100
    %791 = vmatpush.msra.mxu0 %v99
    %792 = vmatpush.msra.mxu0 %v98
    %793 = vmatpush.msra.mxu0 %v97
    %794 = vmatpush.msra.mxu0 %v96
    %795 = vmatpush.msra.mxu0 %v95
    %796 = vmatpush.msra.mxu0 %v94
    %797 = vmatmul.f32.gmra.mxu0 %v626
    %v798 = vpop.f32.mrf.mxu0
    %v799 = vadd.f32 %v779, %v798
    %800 = vdwg.mxu0
    %801 = vmatpush.msra.mxu0 %v125
    %802 = vmatpush.msra.mxu0 %v124
    %803 = vmatpush.msra.mxu0 %v123
    %804 = vmatpush.msra.mxu0 %v122
    %805 = vmatpush.msra.mxu0 %v121
    %806 = vmatpush.msra.mxu0 %v120
    %807 = vmatpush.msra.mxu0 %v119
    %808 = vmatpush.msra.mxu0 %v118
    %809 = vmatpush.msra.mxu0 %v117
    %810 = vmatpush.msra.mxu0 %v116
    %811 = vmatpush.msra.mxu0 %v115
    %812 = vmatpush.msra.mxu0 %v114
    %813 = vmatpush.msra.mxu0 %v113
    %814 = vmatpush.msra.mxu0 %v112
    %815 = vmatpush.msra.mxu0 %v111
    %816 = vmatpush.msra.mxu0 %v110
    %817 = vmatmul.f32.gmra.mxu0 %v627
    %v818 = vpop.f32.mrf.mxu0
    %v819 = vadd.f32 %v799, %v818
    %820 = vdwg.mxu0
    %821 = vmatpush.msra.mxu0 %v141
    %822 = vmatpush.msra.mxu0 %v140
    %823 = vmatpush.msra.mxu0 %v139
    %824 = vmatpush.msra.mxu0 %v138
    %825 = vmatpush.msra.mxu0 %v137
    %826 = vmatpush.msra.mxu0 %v136
    %827 = vmatpush.msra.mxu0 %v135
    %828 = vmatpush.msra.mxu0 %v134
    %829 = vmatpush.msra.mxu0 %v133
    %830 = vmatpush.msra.mxu0 %v132
    %831 = vmatpush.msra.mxu0 %v131
    %832 = vmatpush.msra.mxu0 %v130
    %833 = vmatpush.msra.mxu0 %v129
    %834 = vmatpush.msra.mxu0 %v128
    %835 = vmatpush.msra.mxu0 %v127
    %836 = vmatpush.msra.mxu0 %v126
    %837 = vmatmul.f32.gmra.mxu0 %v628
    %v838 = vpop.f32.mrf.mxu0
    %v839 = vadd.f32 %v819, %v838
    %840 = vdwg.mxu0
    %841 = vmatpush.msra.mxu0 %v157
    %842 = vmatpush.msra.mxu0 %v156
    %843 = vmatpush.msra.mxu0 %v155
    %844 = vmatpush.msra.mxu0 %v154
    %845 = vmatpush.msra.mxu0 %v153
    %846 = vmatpush.msra.mxu0 %v152
    %847 = vmatpush.msra.mxu0 %v151
    %848 = vmatpush.msra.mxu0 %v150
    %849 = vmatpush.msra.mxu0 %v149
    %850 = vmatpush.msra.mxu0 %v148
    %851 = vmatpush.msra.mxu0 %v147
    %852 = vmatpush.msra.mxu0 %v146
    %853 = vmatpush.msra.mxu0 %v145
    %854 = vmatpush.msra.mxu0 %v144
    %855 = vmatpush.msra.mxu0 %v143
    %856 = vmatpush.msra.mxu0 %v142
    %857 = vmatmul.f32.gmra.mxu0 %v629
    %v858 = vpop.f32.mrf.mxu0
    %v859 = vadd.f32 %v839, %v858
    %860 = vdwg.mxu0
    %861 = vmatpush.msra.mxu0 %v173
    %862 = vmatpush.msra.mxu0 %v172
    %863 = vmatpush.msra.mxu0 %v171
    %864 = vmatpush.msra.mxu0 %v170
    %865 = vmatpush.msra.mxu0 %v169
    %866 = vmatpush.msra.mxu0 %v168
    %867 = vmatpush.msra.mxu0 %v167
    %868 = vmatpush.msra.mxu0 %v166
    %869 = vmatpush.msra.mxu0 %v165
    %870 = vmatpush.msra.mxu0 %v164
    %871 = vmatpush.msra.mxu0 %v163
    %872 = vmatpush.msra.mxu0 %v162
    %873 = vmatpush.msra.mxu0 %v161
    %874 = vmatpush.msra.mxu0 %v160
    %875 = vmatpush.msra.mxu0 %v159
    %876 = vmatpush.msra.mxu0 %v158
    %877 = vmatmul.f32.gmra.mxu0 %v632
    %v878 = vpop.f32.mrf.mxu0
    %v879 = vadd.f32 %v859, %v878
    %880 = vdwg.mxu0
    %881 = vmatpush.msra.mxu0 %v189
    %882 = vmatpush.msra.mxu0 %v188
    %883 = vmatpush.msra.mxu0 %v187
    %884 = vmatpush.msra.mxu0 %v186
    %885 = vmatpush.msra.mxu0 %v185
    %886 = vmatpush.msra.mxu0 %v184
    %887 = vmatpush.msra.mxu0 %v183
    %888 = vmatpush.msra.mxu0 %v182
    %889 = vmatpush.msra.mxu0 %v181
    %890 = vmatpush.msra.mxu0 %v180
    %891 = vmatpush.msra.mxu0 %v179
    %892 = vmatpush.msra.mxu0 %v178
    %893 = vmatpush.msra.mxu0 %v177
    %894 = vmatpush.msra.mxu0 %v176
    %895 = vmatpush.msra.mxu0 %v175
    %896 = vmatpush.msra.mxu0 %v174
    %897 = vmatmul.f32.gmra.mxu0 %v633
    %v898 = vpop.f32.mrf.mxu0
    %v899 = vadd.f32 %v879, %v898
    %900 = vdwg.mxu0
    %901 = vmatpush.msra.mxu0 %v205
    %902 = vmatpush.msra.mxu0 %v204
    %903 = vmatpush.msra.mxu0 %v203
    %904 = vmatpush.msra.mxu0 %v202
    %905 = vmatpush.msra.mxu0 %v201
    %906 = vmatpush.msra.mxu0 %v200
    %907 = vmatpush.msra.mxu0 %v199
    %908 = vmatpush.msra.mxu0 %v198
    %909 = vmatpush.msra.mxu0 %v197
    %910 = vmatpush.msra.mxu0 %v196
    %911 = vmatpush.msra.mxu0 %v195
    %912 = vmatpush.msra.mxu0 %v194
    %913 = vmatpush.msra.mxu0 %v193
    %914 = vmatpush.msra.mxu0 %v192
    %915 = vmatpush.msra.mxu0 %v191
    %916 = vmatpush.msra.mxu0 %v190
    %917 = vmatmul.f32.gmra.mxu0 %v634
    %v918 = vpop.f32.mrf.mxu0
    %v919 = vadd.f32 %v899, %v918
    %920 = vdwg.mxu0
    %921 = vmatpush.msra.mxu0 %v221
    %922 = vmatpush.msra.mxu0 %v220
    %923 = vmatpush.msra.mxu0 %v219
    %924 = vmatpush.msra.mxu0 %v218
    %925 = vmatpush.msra.mxu0 %v217
    %926 = vmatpush.msra.mxu0 %v216
    %927 = vmatpush.msra.mxu0 %v215
    %928 = vmatpush.msra.mxu0 %v214
    %929 = vmatpush.msra.mxu0 %v213
    %930 = vmatpush.msra.mxu0 %v212
    %931 = vmatpush.msra.mxu0 %v211
    %932 = vmatpush.msra.mxu0 %v210
    %933 = vmatpush.msra.mxu0 %v209
    %934 = vmatpush.msra.mxu0 %v208
    %935 = vmatpush.msra.mxu0 %v207
    %936 = vmatpush.msra.mxu0 %v206
    %937 = vmatmul.f32.gmra.mxu0 %v635
    %v938 = vpop.f32.mrf.mxu0
    %v939 = vadd.f32 %v919, %v938
    %940 = vdwg.mxu0
    %941 = vmatpush.msra.mxu0 %v237
    %942 = vmatpush.msra.mxu0 %v236
    %943 = vmatpush.msra.mxu0 %v235
    %944 = vmatpush.msra.mxu0 %v234
    %945 = vmatpush.msra.mxu0 %v233
    %946 = vmatpush.msra.mxu0 %v232
    %947 = vmatpush.msra.mxu0 %v231
    %948 = vmatpush.msra.mxu0 %v230
    %949 = vmatpush.msra.mxu0 %v229
    %950 = vmatpush.msra.mxu0 %v228
    %951 = vmatpush.msra.mxu0 %v227
    %952 = vmatpush.msra.mxu0 %v226
    %953 = vmatpush.msra.mxu0 %v225
    %954 = vmatpush.msra.mxu0 %v224
    %955 = vmatpush.msra.mxu0 %v223
    %956 = vmatpush.msra.mxu0 %v222
    %957 = vmatmul.f32.gmra.mxu0 %v636
    %v958 = vpop.f32.mrf.mxu0
    %v959 = vadd.f32 %v939, %v958
    %960 = vdwg.mxu0
    %961 = vmatpush.msra.mxu0 %v253
    %962 = vmatpush.msra.mxu0 %v252
    %963 = vmatpush.msra.mxu0 %v251
    %964 = vmatpush.msra.mxu0 %v250
    %965 = vmatpush.msra.mxu0 %v249
    %966 = vmatpush.msra.mxu0 %v248
    %967 = vmatpush.msra.mxu0 %v247
    %968 = vmatpush.msra.mxu0 %v246
    %969 = vmatpush.msra.mxu0 %v245
    %970 = vmatpush.msra.mxu0 %v244
    %971 = vmatpush.msra.mxu0 %v243
    %972 = vmatpush.msra.mxu0 %v242
    %973 = vmatpush.msra.mxu0 %v241
    %974 = vmatpush.msra.mxu0 %v240
    %975 = vmatpush.msra.mxu0 %v239
    %976 = vmatpush.msra.mxu0 %v238
    %977 = vmatmul.f32.gmra.mxu0 %v637
    %v978 = vpop.f32.mrf.mxu0
    %v979 = vadd.f32 %v959, %v978
    %980 = vdwg.mxu0
    %981 = vmatpush.msra.mxu0 %v269
    %982 = vmatpush.msra.mxu0 %v268
    %983 = vmatpush.msra.mxu0 %v267
    %984 = vmatpush.msra.mxu0 %v266
    %985 = vmatpush.msra.mxu0 %v265
    %986 = vmatpush.msra.mxu0 %v264
    %987 = vmatpush.msra.mxu0 %v263
    %988 = vmatpush.msra.mxu0 %v262
    %989 = vmatpush.msra.mxu0 %v261
    %990 = vmatpush.msra.mxu0 %v260
    %991 = vmatpush.msra.mxu0 %v259
    %992 = vmatpush.msra.mxu0 %v258
    %993 = vmatpush.msra.mxu0 %v257
    %994 = vmatpush.msra.mxu0 %v256
    %995 = vmatpush.msra.mxu0 %v255
    %996 = vmatpush.msra.mxu0 %v254
    %997 = vmatmul.f32.gmra.mxu0 %v638
    %v998 = vpop.f32.mrf.mxu0
    %v999 = vadd.f32 %v979, %v998
    %1000 = vdwg.mxu0
    %1001 = vmatpush.msra.mxu0 %v285
    %1002 = vmatpush.msra.mxu0 %v284
    %1003 = vmatpush.msra.mxu0 %v283
    %1004 = vmatpush.msra.mxu0 %v282
    %1005 = vmatpush.msra.mxu0 %v281
    %1006 = vmatpush.msra.mxu0 %v280
    %1007 = vmatpush.msra.mxu0 %v279
    %1008 = vmatpush.msra.mxu0 %v278
    %1009 = vmatpush.msra.mxu0 %v277
    %1010 = vmatpush.msra.mxu0 %v276
    %1011 = vmatpush.msra.mxu0 %v275
    %1012 = vmatpush.msra.mxu0 %v274
    %1013 = vmatpush.msra.mxu0 %v273
    %1014 = vmatpush.msra.mxu0 %v272
    %1015 = vmatpush.msra.mxu0 %v271
    %1016 = vmatpush.msra.mxu0 %v270
    %1017 = vmatmul.f32.gmra.mxu0 %v639
    %v1018 = vpop.f32.mrf.mxu0
    %v1019 = vadd.f32 %v999, %v1018
    %1020 = vdwg.mxu0
    %1021 = vmatpush.msra.mxu0 %v301
    %1022 = vmatpush.msra.mxu0 %v300
    %1023 = vmatpush.msra.mxu0 %v299
    %1024 = vmatpush.msra.mxu0 %v298
    %1025 = vmatpush.msra.mxu0 %v297
    %1026 = vmatpush.msra.mxu0 %v296
    %1027 = vmatpush.msra.mxu0 %v295
    %1028 = vmatpush.msra.mxu0 %v294
    %1029 = vmatpush.msra.mxu0 %v293
    %1030 = vmatpush.msra.mxu0 %v292
    %1031 = vmatpush.msra.mxu0 %v291
    %1032 = vmatpush.msra.mxu0 %v290
    %1033 = vmatpush.msra.mxu0 %v289
    %1034 = vmatpush.msra.mxu0 %v288
    %1035 = vmatpush.msra.mxu0 %v287
    %1036 = vmatpush.msra.mxu0 %v286
    %1037 = vmatmul.f32.gmra.mxu0 %v642
    %v1038 = vpop.f32.mrf.mxu0
    %v1039 = vadd.f32 %v1019, %v1038
    %1040 = vdwg.mxu0
    %1041 = vmatpush.msra.mxu0 %v317
    %1042 = vmatpush.msra.mxu0 %v316
    %1043 = vmatpush.msra.mxu0 %v315
    %1044 = vmatpush.msra.mxu0 %v314
    %1045 = vmatpush.msra.mxu0 %v313
    %1046 = vmatpush.msra.mxu0 %v312
    %1047 = vmatpush.msra.mxu0 %v311
    %1048 = vmatpush.msra.mxu0 %v310
    %1049 = vmatpush.msra.mxu0 %v309
    %1050 = vmatpush.msra.mxu0 %v308
    %1051 = vmatpush.msra.mxu0 %v307
    %1052 = vmatpush.msra.mxu0 %v306
    %1053 = vmatpush.msra.mxu0 %v305
    %1054 = vmatpush.msra.mxu0 %v304
    %1055 = vmatpush.msra.mxu0 %v303
    %1056 = vmatpush.msra.mxu0 %v302
    %1057 = vmatmul.f32.gmra.mxu0 %v643
    %v1058 = vpop.f32.mrf.mxu0
    %v1059 = vadd.f32 %v1039, %v1058
    %1060 = vdwg.mxu0
    %1061 = vmatpush.msra.mxu0 %v333
    %1062 = vmatpush.msra.mxu0 %v332
    %1063 = vmatpush.msra.mxu0 %v331
    %1064 = vmatpush.msra.mxu0 %v330
    %1065 = vmatpush.msra.mxu0 %v329
    %1066 = vmatpush.msra.mxu0 %v328
    %1067 = vmatpush.msra.mxu0 %v327
    %1068 = vmatpush.msra.mxu0 %v326
    %1069 = vmatpush.msra.mxu0 %v325
    %1070 = vmatpush.msra.mxu0 %v324
    %1071 = vmatpush.msra.mxu0 %v323
    %1072 = vmatpush.msra.mxu0 %v322
    %1073 = vmatpush.msra.mxu0 %v321
    %1074 = vmatpush.msra.mxu0 %v320
    %1075 = vmatpush.msra.mxu0 %v319
    %1076 = vmatpush.msra.mxu0 %v318
    %1077 = vmatmul.f32.gmra.mxu0 %v644
    %v1078 = vpop.f32.mrf.mxu0
    %v1079 = vadd.f32 %v1059, %v1078
    %1080 = vdwg.mxu0
    %1081 = vmatpush.msra.mxu0 %v349
    %1082 = vmatpush.msra.mxu0 %v348
    %1083 = vmatpush.msra.mxu0 %v347
    %1084 = vmatpush.msra.mxu0 %v346
    %1085 = vmatpush.msra.mxu0 %v345
    %1086 = vmatpush.msra.mxu0 %v344
    %1087 = vmatpush.msra.mxu0 %v343
    %1088 = vmatpush.msra.mxu0 %v342
    %1089 = vmatpush.msra.mxu0 %v341
    %1090 = vmatpush.msra.mxu0 %v340
    %1091 = vmatpush.msra.mxu0 %v339
    %1092 = vmatpush.msra.mxu0 %v338
    %1093 = vmatpush.msra.mxu0 %v337
    %1094 = vmatpush.msra.mxu0 %v336
    %1095 = vmatpush.msra.mxu0 %v335
    %1096 = vmatpush.msra.mxu0 %v334
    %1097 = vmatmul.f32.gmra.mxu0 %v645
    %v1098 = vpop.f32.mrf.mxu0
    %v1099 = vadd.f32 %v1079, %v1098
    %1100 = vdwg.mxu0
    %1101 = vmatpush.msra.mxu0 %v365
    %1102 = vmatpush.msra.mxu0 %v364
    %1103 = vmatpush.msra.mxu0 %v363
    %1104 = vmatpush.msra.mxu0 %v362
    %1105 = vmatpush.msra.mxu0 %v361
    %1106 = vmatpush.msra.mxu0 %v360
    %1107 = vmatpush.msra.mxu0 %v359
    %1108 = vmatpush.msra.mxu0 %v358
    %1109 = vmatpush.msra.mxu0 %v357
    %1110 = vmatpush.msra.mxu0 %v356
    %1111 = vmatpush.msra.mxu0 %v355
    %1112 = vmatpush.msra.mxu0 %v354
    %1113 = vmatpush.msra.mxu0 %v353
    %1114 = vmatpush.msra.mxu0 %v352
    %1115 = vmatpush.msra.mxu0 %v351
    %1116 = vmatpush.msra.mxu0 %v350
    %1117 = vmatmul.f32.gmra.mxu0 %v646
    %v1118 = vpop.f32.mrf.mxu0
    %v1119 = vadd.f32 %v1099, %v1118
    %1120 = vdwg.mxu0
    %1121 = vmatpush.msra.mxu0 %v381
    %1122 = vmatpush.msra.mxu0 %v380
    %1123 = vmatpush.msra.mxu0 %v379
    %1124 = vmatpush.msra.mxu0 %v378
    %1125 = vmatpush.msra.mxu0 %v377
    %1126 = vmatpush.msra.mxu0 %v376
    %1127 = vmatpush.msra.mxu0 %v375
    %1128 = vmatpush.msra.mxu0 %v374
    %1129 = vmatpush.msra.mxu0 %v373
    %1130 = vmatpush.msra.mxu0 %v372
    %1131 = vmatpush.msra.mxu0 %v371
    %1132 = vmatpush.msra.mxu0 %v370
    %1133 = vmatpush.msra.mxu0 %v369
    %1134 = vmatpush.msra.mxu0 %v368
    %1135 = vmatpush.msra.mxu0 %v367
    %1136 = vmatpush.msra.mxu0 %v366
    %1137 = vmatmul.f32.gmra.mxu0 %v647
    %v1138 = vpop.f32.mrf.mxu0
    %v1139 = vadd.f32 %v1119, %v1138
    %1140 = vdwg.mxu0
    %1141 = vmatpush.msra.mxu0 %v397
    %1142 = vmatpush.msra.mxu0 %v396
    %1143 = vmatpush.msra.mxu0 %v395
    %1144 = vmatpush.msra.mxu0 %v394
    %1145 = vmatpush.msra.mxu0 %v393
    %1146 = vmatpush.msra.mxu0 %v392
    %1147 = vmatpush.msra.mxu0 %v391
    %1148 = vmatpush.msra.mxu0 %v390
    %1149 = vmatpush.msra.mxu0 %v389
    %1150 = vmatpush.msra.mxu0 %v388
    %1151 = vmatpush.msra.mxu0 %v387
    %1152 = vmatpush.msra.mxu0 %v386
    %1153 = vmatpush.msra.mxu0 %v385
    %1154 = vmatpush.msra.mxu0 %v384
    %1155 = vmatpush.msra.mxu0 %v383
    %1156 = vmatpush.msra.mxu0 %v382
    %1157 = vmatmul.f32.gmra.mxu0 %v648
    %v1158 = vpop.f32.mrf.mxu0
    %v1159 = vadd.f32 %v1139, %v1158
    %1160 = vdwg.mxu0
    %1161 = vmatpush.msra.mxu0 %v413
    %1162 = vmatpush.msra.mxu0 %v412
    %1163 = vmatpush.msra.mxu0 %v411
    %1164 = vmatpush.msra.mxu0 %v410
    %1165 = vmatpush.msra.mxu0 %v409
    %1166 = vmatpush.msra.mxu0 %v408
    %1167 = vmatpush.msra.mxu0 %v407
    %1168 = vmatpush.msra.mxu0 %v406
    %1169 = vmatpush.msra.mxu0 %v405
    %1170 = vmatpush.msra.mxu0 %v404
    %1171 = vmatpush.msra.mxu0 %v403
    %1172 = vmatpush.msra.mxu0 %v402
    %1173 = vmatpush.msra.mxu0 %v401
    %1174 = vmatpush.msra.mxu0 %v400
    %1175 = vmatpush.msra.mxu0 %v399
    %1176 = vmatpush.msra.mxu0 %v398
    %1177 = vmatmul.f32.gmra.mxu0 %v649
    %v1178 = vpop.f32.mrf.mxu0
    %v1179 = vadd.f32 %v1159, %v1178
    %1180 = vdwg.mxu0
    %1181 = vmatpush.msra.mxu0 %v429
    %1182 = vmatpush.msra.mxu0 %v428
    %1183 = vmatpush.msra.mxu0 %v427
    %1184 = vmatpush.msra.mxu0 %v426
    %1185 = vmatpush.msra.mxu0 %v425
    %1186 = vmatpush.msra.mxu0 %v424
    %1187 = vmatpush.msra.mxu0 %v423
    %1188 = vmatpush.msra.mxu0 %v422
    %1189 = vmatpush.msra.mxu0 %v421
    %1190 = vmatpush.msra.mxu0 %v420
    %1191 = vmatpush.msra.mxu0 %v419
    %1192 = vmatpush.msra.mxu0 %v418
    %1193 = vmatpush.msra.mxu0 %v417
    %1194 = vmatpush.msra.mxu0 %v416
    %1195 = vmatpush.msra.mxu0 %v415
    %1196 = vmatpush.msra.mxu0 %v414
    %1197 = vmatmul.f32.gmra.mxu0 %v652
    %v1198 = vpop.f32.mrf.mxu0
    %v1199 = vadd.f32 %v1179, %v1198
    %1200 = vdwg.mxu0
    %1201 = vmatpush.msra.mxu0 %v445
    %1202 = vmatpush.msra.mxu0 %v444
    %1203 = vmatpush.msra.mxu0 %v443
    %1204 = vmatpush.msra.mxu0 %v442
    %1205 = vmatpush.msra.mxu0 %v441
    %1206 = vmatpush.msra.mxu0 %v440
    %1207 = vmatpush.msra.mxu0 %v439
    %1208 = vmatpush.msra.mxu0 %v438
    %1209 = vmatpush.msra.mxu0 %v437
    %1210 = vmatpush.msra.mxu0 %v436
    %1211 = vmatpush.msra.mxu0 %v435
    %1212 = vmatpush.msra.mxu0 %v434
    %1213 = vmatpush.msra.mxu0 %v433
    %1214 = vmatpush.msra.mxu0 %v432
    %1215 = vmatpush.msra.mxu0 %v431
    %1216 = vmatpush.msra.mxu0 %v430
    %1217 = vmatmul.f32.gmra.mxu0 %v653
    %v1218 = vpop.f32.mrf.mxu0
    %v1219 = vadd.f32 %v1199, %v1218
    %1220 = vdwg.mxu0
    %1221 = vmatpush.msra.mxu0 %v461
    %1222 = vmatpush.msra.mxu0 %v460
    %1223 = vmatpush.msra.mxu0 %v459
    %1224 = vmatpush.msra.mxu0 %v458
    %1225 = vmatpush.msra.mxu0 %v457
    %1226 = vmatpush.msra.mxu0 %v456
    %1227 = vmatpush.msra.mxu0 %v455
    %1228 = vmatpush.msra.mxu0 %v454
    %1229 = vmatpush.msra.mxu0 %v453
    %1230 = vmatpush.msra.mxu0 %v452
    %1231 = vmatpush.msra.mxu0 %v451
    %1232 = vmatpush.msra.mxu0 %v450
    %1233 = vmatpush.msra.mxu0 %v449
    %1234 = vmatpush.msra.mxu0 %v448
    %1235 = vmatpush.msra.mxu0 %v447
    %1236 = vmatpush.msra.mxu0 %v446
    %1237 = vmatmul.f32.gmra.mxu0 %v654
    %v1238 = vpop.f32.mrf.mxu0
    %v1239 = vadd.f32 %v1219, %v1238
    %1240 = vdwg.mxu0
    %1241 = vmatpush.msra.mxu0 %v477
    %1242 = vmatpush.msra.mxu0 %v476
    %1243 = vmatpush.msra.mxu0 %v475
    %1244 = vmatpush.msra.mxu0 %v474
    %1245 = vmatpush.msra.mxu0 %v473
    %1246 = vmatpush.msra.mxu0 %v472
    %1247 = vmatpush.msra.mxu0 %v471
    %1248 = vmatpush.msra.mxu0 %v470
    %1249 = vmatpush.msra.mxu0 %v469
    %1250 = vmatpush.msra.mxu0 %v468
    %1251 = vmatpush.msra.mxu0 %v467
    %1252 = vmatpush.msra.mxu0 %v466
    %1253 = vmatpush.msra.mxu0 %v465
    %1254 = vmatpush.msra.mxu0 %v464
    %1255 = vmatpush.msra.mxu0 %v463
    %1256 = vmatpush.msra.mxu0 %v462
    %1257 = vmatmul.f32.gmra.mxu0 %v655
    %v1258 = vpop.f32.mrf.mxu0
    %v1259 = vadd.f32 %v1239, %v1258
    %1260 = vdwg.mxu0
    %1261 = vmatpush.msra.mxu0 %v493
    %1262 = vmatpush.msra.mxu0 %v492
    %1263 = vmatpush.msra.mxu0 %v491
    %1264 = vmatpush.msra.mxu0 %v490
    %1265 = vmatpush.msra.mxu0 %v489
    %1266 = vmatpush.msra.mxu0 %v488
    %1267 = vmatpush.msra.mxu0 %v487
    %1268 = vmatpush.msra.mxu0 %v486
    %1269 = vmatpush.msra.mxu0 %v485
    %1270 = vmatpush.msra.mxu0 %v484
    %1271 = vmatpush.msra.mxu0 %v483
    %1272 = vmatpush.msra.mxu0 %v482
    %1273 = vmatpush.msra.mxu0 %v481
    %1274 = vmatpush.msra.mxu0 %v480
    %1275 = vmatpush.msra.mxu0 %v479
    %1276 = vmatpush.msra.mxu0 %v478
    %1277 = vmatmul.f32.gmra.mxu0 %v656
    %v1278 = vpop.f32.mrf.mxu0
    %v1279 = vadd.f32 %v1259, %v1278
    %1280 = vdwg.mxu0
    %1281 = vmatpush.msra.mxu0 %v509
    %1282 = vmatpush.msra.mxu0 %v508
    %1283 = vmatpush.msra.mxu0 %v507
    %1284 = vmatpush.msra.mxu0 %v506
    %1285 = vmatpush.msra.mxu0 %v505
    %1286 = vmatpush.msra.mxu0 %v504
    %1287 = vmatpush.msra.mxu0 %v503
    %1288 = vmatpush.msra.mxu0 %v502
    %1289 = vmatpush.msra.mxu0 %v501
    %1290 = vmatpush.msra.mxu0 %v500
    %1291 = vmatpush.msra.mxu0 %v499
    %1292 = vmatpush.msra.mxu0 %v498
    %1293 = vmatpush.msra.mxu0 %v497
    %1294 = vmatpush.msra.mxu0 %v496
    %1295 = vmatpush.msra.mxu0 %v495
    %1296 = vmatpush.msra.mxu0 %v494
    %1297 = vmatmul.f32.gmra.mxu0 %v657
    %v1298 = vpop.f32.mrf.mxu0
    %v1299 = vadd.f32 %v1279, %v1298
    %1300 = vdwg.mxu0
    %1301 = vmatpush.msra.mxu0 %v525
    %1302 = vmatpush.msra.mxu0 %v524
    %1303 = vmatpush.msra.mxu0 %v523
    %1304 = vmatpush.msra.mxu0 %v522
    %1305 = vmatpush.msra.mxu0 %v521
    %1306 = vmatpush.msra.mxu0 %v520
    %1307 = vmatpush.msra.mxu0 %v519
    %1308 = vmatpush.msra.mxu0 %v518
    %1309 = vmatpush.msra.mxu0 %v517
    %1310 = vmatpush.msra.mxu0 %v516
    %1311 = vmatpush.msra.mxu0 %v515
    %1312 = vmatpush.msra.mxu0 %v514
    %1313 = vmatpush.msra.mxu0 %v513
    %1314 = vmatpush.msra.mxu0 %v512
    %1315 = vmatpush.msra.mxu0 %v511
    %1316 = vmatpush.msra.mxu0 %v510
    %1317 = vmatmul.f32.gmra.mxu0 %v658
    %v1318 = vpop.f32.mrf.mxu0
    %v1319 = vadd.f32 %v1299, %v1318
    %1320 = vdwg.mxu0
    %1321 = vmatpush.msra.mxu0 %v541
    %1322 = vmatpush.msra.mxu0 %v540
    %1323 = vmatpush.msra.mxu0 %v539
    %1324 = vmatpush.msra.mxu0 %v538
    %1325 = vmatpush.msra.mxu0 %v537
    %1326 = vmatpush.msra.mxu0 %v536
    %1327 = vmatpush.msra.mxu0 %v535
    %1328 = vmatpush.msra.mxu0 %v534
    %1329 = vmatpush.msra.mxu0 %v533
    %1330 = vmatpush.msra.mxu0 %v532
    %1331 = vmatpush.msra.mxu0 %v531
    %1332 = vmatpush.msra.mxu0 %v530
    %1333 = vmatpush.msra.mxu0 %v529
    %1334 = vmatpush.msra.mxu0 %v528
    %1335 = vmatpush.msra.mxu0 %v527
    %1336 = vmatpush.msra.mxu0 %v526
    %1337 = vmatmul.f32.gmra.mxu0 %v659
    %v1338 = vpop.f32.mrf.mxu0
    %v1339 = vadd.f32 %v1319, %v1338
    %1340 = vdwg.mxu0
    %1341 = vmatpush.msra.mxu0 %v557
    %1342 = vmatpush.msra.mxu0 %v556
    %1343 = vmatpush.msra.mxu0 %v555
    %1344 = vmatpush.msra.mxu0 %v554
    %1345 = vmatpush.msra.mxu0 %v553
    %1346 = vmatpush.msra.mxu0 %v552
    %1347 = vmatpush.msra.mxu0 %v551
    %1348 = vmatpush.msra.mxu0 %v550
    %1349 = vmatpush.msra.mxu0 %v549
    %1350 = vmatpush.msra.mxu0 %v548
    %1351 = vmatpush.msra.mxu0 %v547
    %1352 = vmatpush.msra.mxu0 %v546
    %1353 = vmatpush.msra.mxu0 %v545
    %1354 = vmatpush.msra.mxu0 %v544
    %1355 = vmatpush.msra.mxu0 %v543
    %1356 = vmatpush.msra.mxu0 %v542
    %1357 = vmatmul.f32.gmra.mxu0 %v661
    %v1358 = vpop.f32.mrf.mxu0
    %v1359 = vadd.f32 %v1339, %v1358
    %1360 = vdwg.mxu0
    %1361 = vmatpush.msra.mxu0 %v573
    %1362 = vmatpush.msra.mxu0 %v572
    %1363 = vmatpush.msra.mxu0 %v571
    %1364 = vmatpush.msra.mxu0 %v570
    %1365 = vmatpush.msra.mxu0 %v569
    %1366 = vmatpush.msra.mxu0 %v568
    %1367 = vmatpush.msra.mxu0 %v567
    %1368 = vmatpush.msra.mxu0 %v566
    %1369 = vmatpush.msra.mxu0 %v565
    %1370 = vmatpush.msra.mxu0 %v564
    %1371 = vmatpush.msra.mxu0 %v563
    %1372 = vmatpush.msra.mxu0 %v562
    %1373 = vmatpush.msra.mxu0 %v561
    %1374 = vmatpush.msra.mxu0 %v560
    %1375 = vmatpush.msra.mxu0 %v559
    %1376 = vmatpush.msra.mxu0 %v558
    %1377 = vmatmul.f32.gmra.mxu0 %v662
    %v1378 = vpop.f32.mrf.mxu0
    %v1379 = vadd.f32 %v1359, %v1378
    %1380 = vdwg.mxu0
    %1381 = vmatpush.msra.mxu0 %v589
    %1382 = vmatpush.msra.mxu0 %v588
    %1383 = vmatpush.msra.mxu0 %v587
    %1384 = vmatpush.msra.mxu0 %v586
    %1385 = vmatpush.msra.mxu0 %v585
    %1386 = vmatpush.msra.mxu0 %v584
    %1387 = vmatpush.msra.mxu0 %v583
    %1388 = vmatpush.msra.mxu0 %v582
    %1389 = vmatpush.msra.mxu0 %v581
    %1390 = vmatpush.msra.mxu0 %v580
    %1391 = vmatpush.msra.mxu0 %v579
    %1392 = vmatpush.msra.mxu0 %v578
    %1393 = vmatpush.msra.mxu0 %v577
    %1394 = vmatpush.msra.mxu0 %v576
    %1395 = vmatpush.msra.mxu0 %v575
    %1396 = vmatpush.msra.mxu0 %v574
    %1397 = vmatmul.f32.gmra.mxu0 %v663
    %v1398 = vpop.f32.mrf.mxu0
    %v1399 = vadd.f32 %v1379, %v1398
    %1400 = vdwg.mxu0
    %1401 = vmatpush.msra.mxu0 %v605
    %1402 = vmatpush.msra.mxu0 %v604
    %1403 = vmatpush.msra.mxu0 %v603
    %1404 = vmatpush.msra.mxu0 %v602
    %1405 = vmatpush.msra.mxu0 %v601
    %1406 = vmatpush.msra.mxu0 %v600
    %1407 = vmatpush.msra.mxu0 %v599
    %1408 = vmatpush.msra.mxu0 %v598
    %1409 = vmatpush.msra.mxu0 %v597
    %1410 = vmatpush.msra.mxu0 %v596
    %1411 = vmatpush.msra.mxu0 %v595
    %1412 = vmatpush.msra.mxu0 %v594
    %1413 = vmatpush.msra.mxu0 %v593
    %1414 = vmatpush.msra.mxu0 %v592
    %1415 = vmatpush.msra.mxu0 %v591
    %1416 = vmatpush.msra.mxu0 %v590
    %1417 = vmatmul.f32.gmra.mxu0 %v664
    %v1418 = vpop.f32.mrf.mxu0
    %v1419 = vadd.f32 %v1399, %v1418
    %1420 = vdwg.mxu0
    %v1421 = vmax.f32 %v1419, 0.0
    %v1422 = vld [vmem:[%s3] sm:$0xff]
    %v1423 = vld [vmem:[%s3 + $0x8] sm:$0xff]
    %v1424 = vld [vmem:[%s3 + $0x10] sm:$0xff]
    %v1425 = vld [vmem:[%s3 + $0x18] sm:$0xff]
    %v1426 = vld [vmem:[%s3 + $0x20] sm:$0xff]
    %v1427 = vld [vmem:[%s3 + $0x28] sm:$0xff]
    %v1428 = vld [vmem:[%s3 + $0x30] sm:$0xff]
    %v1429 = vld [vmem:[%s3 + $0x38] sm:$0xff]
    %v1430 = vld [vmem:[%s3 + $0x40] sm:$0xff]
    %v1431 = vld [vmem:[%s3 + $0x48] sm:$0xff]
    %v1432 = vld [vmem:[%s3 + $0x50] sm:$0xff]
    %v1433 = vld [vmem:[%s3 + $0x58] sm:$0xff]
    %v1434 = vld [vmem:[%s3 + $0x60] sm:$0xff]
    %v1435 = vld [vmem:[%s3 + $0x68] sm:$0xff]
    %v1436 = vld [vmem:[%s3 + $0x70] sm:$0xff]
    %v1437 = vld [vmem:[%s3 + $0x78] sm:$0xff]
    %v1438 = vld [vmem:[%s4] sm:$0x1]
    %v1440 = vperm.slane %v1438, 0
    %1442 = vmatpush.msra.mxu0 %v1437
    %1443 = vmatpush.msra.mxu0 %v1436
    %1444 = vmatpush.msra.mxu0 %v1435
    %1445 = vmatpush.msra.mxu0 %v1434
    %1446 = vmatpush.msra.mxu0 %v1433
    %1447 = vmatpush.msra.mxu0 %v1432
    %1448 = vmatpush.msra.mxu0 %v1431
    %1449 = vmatpush.msra.mxu0 %v1430
    %1450 = vmatpush.msra.mxu0 %v1429
    %1451 = vmatpush.msra.mxu0 %v1428
    %1452 = vmatpush.msra.mxu0 %v1427
    %1453 = vmatpush.msra.mxu0 %v1426
    %1454 = vmatpush.msra.mxu0 %v1425
    %1455 = vmatpush.msra.mxu0 %v1424
    %1456 = vmatpush.msra.mxu0 %v1423
    %1457 = vmatpush.msra.mxu0 %v1422
    %1458 = vmatmul.f32.gmra.mxu0 %v1421
    %v1459 = vpop.f32.mrf.mxu0
    %v1460 = vadd.f32 %v1440, %v1459
    %1461 = vdwg.mxu0
    %vm1462 = vcmask 9216
    %v1463 = vsel %vm1462, %v1460, -inf
    %1464 = vmax.xlane.f32.xlu0 %v1463
    %v1465 = vpop.xlane.xlu0 %1464
    %v1466 = vsub.f32 %v1460, %v1465
    %v1467 = vmul.f32 %v1466, 1.442695
    %v1468 = vpow.pop %v1467
    %v1469 = vsel %vm1462, %v1468, 0.0
    %1470 = vadd.xlane.f32.xlu0 %v1469
    %v1471 = vpop.xlane.xlu0 %1470
    %v1472 = vlog2.pop %v1471
    %v1473 = vmul.f32 %v1472, 0.6931472
    %v1474 = vsub.f32 %v1466, %v1473
    %1475 = vst.msk [vmem:[#allocation2] sm:$0x3] %vm1462, %v1474
    // Predicated region
    $region22: #{_lambda_.1} parent=1 // pred_check
      _
    $region23: #{_lambda_.1} parent=1 // pred_check_branch
      %1477 = sbr.rel (0) target = $region25
    $region24: #{_lambda_.1} parent=1 // pred_region
      %1479 = vsyncadd [#allocation3], 0
      %s1481 = sshll.u32 [#allocation2], 4
      %s1482 = int_to_ptr.vmem [resolvable:$true] %s1481
      %s1483 = sshll.u32 %s5, 4
      %s1484 = int_to_ptr.hbm [resolvable:$true] %s1483
      %1486 = dma.vmem_to_hbm [thread:$0]  %s1482, 32, %s1484, [#allocation3]
    $region25: #{_lambda_.1} parent=1 // pred_fallthru
      _
    // Predicated region
    $region26: #{_lambda_.1} parent=1 // pred_check
      _
    $region27: #{_lambda_.1} parent=1 // pred_check_branch
      %1488 = sbr.rel (0) target = $region29
    $region28: #{_lambda_.1} parent=1 // pred_region
      %1490 = dma.done [#allocation3], 32
    $region29: #{_lambda_.1} parent=1 // pred_fallthru
      _
    %1491 = vsyncpa [#allocation3], 1

</llo_original>
